<compile_context>
chip_gen: v7x
topology: tpu7x:2x2x1
jax: 0.10.0
libtpu: 0.0.40
codegen_flags: <defaults>
</compile_context>

<pallas_src>
import jax
import jax.numpy as jnp
from jax.experimental import pallas as pl
from jax.experimental.pallas import tpu as pltpu


def _round_up(x, m):
    return (x + m - 1) // m * m


def _sigmoid_via_tanh(x):
    # sigmoid(x) == 0.5 * tanh(0.5 * x) + 0.5  (same expansion XLA uses for
    # logistic): one EUP push per vreg instead of exp + reciprocal.
    return 0.5 * jnp.tanh(0.5 * x) + 0.5


def lstm_fc_kernel(x_ref, wih_ref, whh_ref, b_ref, wfc_ref, bfc_ref,
                   h0_ref, c0_ref, out_ref, gx_ref, hs_ref):
    """Whole forward pass in one invocation (no grid).

    x_ref   : (S*Bp, I)     inputs, time-major, batch padded to Bp sublanes
    wih_ref : (I, 4*Hp)     W_ih^T, gate order (i, f, o, g), each gate padded to Hp lanes
    whh_ref : (Hp, 4*Hp)    W_hh^T, same layout
    b_ref   : (1, 4*Hp)     b_ih + b_hh, same layout
    wfc_ref : (Hp, Op)      fc.weight^T, output lane-padded to Op
    bfc_ref : (1, Op)
    h0_ref  : (Bp, Hp)      initial hidden state (padded)
    c0_ref  : (Bp, Hp)      initial cell state (padded)
    out_ref : (S*Bp, Op)    fc(h_t) for every step (lane-dense bulk store)
    gx_ref  : (S*Bp, 4*Hp)  VMEM scratch: hoisted input projection (+ bias)
    hs_ref  : (S*Bp, Hp)    VMEM scratch: collected hidden states
    """
    Bp, Hp = h0_ref.shape
    S = x_ref.shape[0] // Bp

    # --- hoisted input projection: one matmul, bias folded in, parked in VMEM
    #     scratch so it is not a 32-vreg live value across the unrolled loop ---
    gx_ref[...] = jnp.dot(x_ref[...], wih_ref[...],
                          preferred_element_type=jnp.float32) + b_ref[...]

    w_hh = whh_ref[...]
    h = h0_ref[...]
    c = c0_ref[...]

    # --- fully unrolled recurrence: only the h-dependent work is serial ---
    for t in range(S):
        gates = gx_ref[pl.ds(t * Bp, Bp), :] + jnp.dot(
            h, w_hh, preferred_element_type=jnp.float32)
        # Gate layout (i, f, o, g): one fused sigmoid over the first 3 gates
        # (whole-vreg slices afterwards, Hp % 128 == 0) + one tanh.
        sig = _sigmoid_via_tanh(gates[:, 0:3 * Hp])
        i_g = sig[:, 0 * Hp:1 * Hp]
        f_g = sig[:, 1 * Hp:2 * Hp]
        o_g = sig[:, 2 * Hp:3 * Hp]
        g_g = jnp.tanh(gates[:, 3 * Hp:4 * Hp])
        c = f_g * c + i_g * g_g
        h = o_g * jnp.tanh(c)
        hs_ref[pl.ds(t * Bp, Bp), :] = h

    # --- fc projection hoisted out of the loop: one matmul + one lane-dense store ---
    out_ref[...] = (jnp.dot(hs_ref[...], wfc_ref[...],
                            preferred_element_type=jnp.float32)
                    + bfc_ref[...]).astype(out_ref.dtype)


@jax.jit
def vanilla_lstm_forward(x, w_ih, w_hh, b_ih, b_hh, w_fc, b_fc, h0, c0):
    """x: (S, B, I) (seq-first, PyTorch nn.LSTM default).  PyTorch weight shapes:
       w_ih (4H, I), w_hh (4H, H), b_ih/b_hh (4H,), w_fc (O, H), b_fc (O,).
       h0/c0: (B, H) (num_layers=1 squeezed).  Returns (S, B, O)."""
    S, B, I = x.shape
    H = h0.shape[1]
    O = w_fc.shape[0]

    Bp = _round_up(B, 8)      # sublane-align the batch
    Hp = _round_up(H, 128)    # lane-align each gate / the hidden state
    Op = _round_up(O, 128)    # lane-dense output

    f32 = jnp.float32
    # PyTorch gate order is (i, f, g, o); reorder to (i, f, o, g) so the kernel
    # applies one sigmoid over the first three gates.
    perm = jnp.array([0, 1, 3, 2])

    # ---- pure-JAX glue (fused under jit): transpose / per-gate pad parameters ----
    w_ih4 = jnp.asarray(w_ih, f32).reshape(4, H, I)[perm]
    w_ih_p = jnp.pad(w_ih4, ((0, 0), (0, Hp - H), (0, 0))
                     ).reshape(4 * Hp, I).T                                       # (I, 4Hp)

    w_hh4 = jnp.asarray(w_hh, f32).reshape(4, H, H)[perm]
    w_hh_p = jnp.pad(w_hh4, ((0, 0), (0, Hp - H), (0, Hp - H))
                     ).reshape(4 * Hp, Hp).T                                      # (Hp, 4Hp)

    b4 = (jnp.asarray(b_ih, f32) + jnp.asarray(b_hh, f32)).reshape(4, H)[perm]
    b_p = jnp.pad(b4, ((0, 0), (0, Hp - H))).reshape(1, 4 * Hp)                   # (1, 4Hp)

    w_fc_p = jnp.pad(jnp.asarray(w_fc, f32), ((0, Op - O), (0, Hp - H))).T        # (Hp, Op)
    b_fc_p = jnp.pad(jnp.asarray(b_fc, f32), (0, Op - O))[None, :]                # (1, Op)

    h0_p = jnp.pad(jnp.asarray(h0, f32), ((0, Bp - B), (0, Hp - H)))              # (Bp, Hp)
    c0_p = jnp.pad(jnp.asarray(c0, f32), ((0, Bp - B), (0, Hp - H)))              # (Bp, Hp)

    x_p = jnp.pad(jnp.asarray(x, f32), ((0, 0), (0, Bp - B), (0, 0))
                  ).reshape(S * Bp, I)                                            # (S*Bp, I)

    vmem = pl.BlockSpec(memory_space=pltpu.MemorySpace.VMEM)

    out2d = pl.pallas_call(
        lstm_fc_kernel,
        out_shape=jax.ShapeDtypeStruct((S * Bp, Op), f32),
        in_specs=[vmem] * 8,
        out_specs=vmem,
        scratch_shapes=[pltpu.VMEM((S * Bp, 4 * Hp), f32),   # gates_x
                        pltpu.VMEM((S * Bp, Hp), f32)],      # hidden states
    )(x_p, w_ih_p, w_hh_p, b_p, w_fc_p, b_fc_p, h0_p, c0_p)

    # TODO(synk): for v7x, shard independent batch tiles across the two TensorCores
    # with a leading "parallel" grid axis once B >= 2*Bp; for long sequences, chunk
    # the time axis with an "arbitrary" grid axis (carry h/c in scratch) and raise
    # vmem_limit_bytes instead of keeping everything resident.
    return out2d.reshape(S, Bp, Op)[:, :B, :O]


def lstm_reference(x, w_ih, w_hh, b_ih, b_hh, w_fc, b_fc, h0, c0):
    """Pure-JAX reference mirroring PyTorch nn.LSTM + nn.Linear semantics."""
    H = h0.shape[1]

    def step(carry, x_t):
        h, c = carry
        gates = x_t @ w_ih.T + b_ih + h @ w_hh.T + b_hh
        i = jax.nn.sigmoid(gates[:, 0 * H:1 * H])
        f = jax.nn.sigmoid(gates[:, 1 * H:2 * H])
        g = jnp.tanh(gates[:, 2 * H:3 * H])
        o = jax.nn.sigmoid(gates[:, 3 * H:4 * H])
        c_new = f * c + i * g
        h_new = o * jnp.tanh(c_new)
        return (h_new, c_new), h_new

    (_, _), hs = jax.lax.scan(step, (h0, c0), x)
    return hs @ w_fc.T + b_fc


if __name__ == "__main__":
    INPUT_SIZE = 9
    HIDDEN_SIZE = 32
    OUTPUT_SIZE = 9
    BATCH = 2
    SEQ = 8

    key = jax.random.PRNGKey(0)
    keys = jax.random.split(key, 10)
    k_scale = 1.0 / jnp.sqrt(HIDDEN_SIZE)

    # Deterministic parameter init (PyTorch-style uniform(-1/sqrt(H), 1/sqrt(H)))
    w_ih = jax.random.uniform(keys[0], (4 * HIDDEN_SIZE, INPUT_SIZE),
                              minval=-k_scale, maxval=k_scale, dtype=jnp.float32)
    w_hh = jax.random.uniform(keys[1], (4 * HIDDEN_SIZE, HIDDEN_SIZE),
                              minval=-k_scale, maxval=k_scale, dtype=jnp.float32)
    b_ih = jax.random.uniform(keys[2], (4 * HIDDEN_SIZE,),
                              minval=-k_scale, maxval=k_scale, dtype=jnp.float32)
    b_hh = jax.random.uniform(keys[3], (4 * HIDDEN_SIZE,),
                              minval=-k_scale, maxval=k_scale, dtype=jnp.float32)
    w_fc = jax.random.uniform(keys[4], (OUTPUT_SIZE, HIDDEN_SIZE),
                              minval=-k_scale, maxval=k_scale, dtype=jnp.float32)
    b_fc = jax.random.uniform(keys[5], (OUTPUT_SIZE,),
                              minval=-k_scale, maxval=k_scale, dtype=jnp.float32)

    # hidden0 = randn * 0.05 (as in _init_hidden), num_layers=1 squeezed
    h0 = jax.random.normal(keys[6], (BATCH, HIDDEN_SIZE), dtype=jnp.float32) * 0.05
    c0 = jax.random.normal(keys[7], (BATCH, HIDDEN_SIZE), dtype=jnp.float32) * 0.05

    # Input: (seq, batch, input_size)
    x = jax.random.normal(keys[8], (SEQ, BATCH, INPUT_SIZE), dtype=jnp.float32)

    out = vanilla_lstm_forward(x, w_ih, w_hh, b_ih, b_hh, w_fc, b_fc, h0, c0)
    out = jax.block_until_ready(out)

    ref = lstm_reference(x, w_ih, w_hh, b_ih, b_hh, w_fc, b_fc, h0, c0)
    ref = jax.block_until_ready(ref)

    assert out.shape == (SEQ, BATCH, OUTPUT_SIZE), out.shape
    max_err = float(jnp.max(jnp.abs(out - ref)))
    assert max_err < 1e-4, f"mismatch vs reference: {max_err}"

    print("KERNEL_OK")
</pallas_src>

<mosaic_0001>
module attributes {stable_mosaic.version = 11 : i64} {
  func.func @lstm_fc_kernel(%arg0: memref<64x9xf32, #tpu.memory_space<vmem>>, %arg1: memref<9x512xf32, #tpu.memory_space<vmem>>, %arg2: memref<128x512xf32, #tpu.memory_space<vmem>>, %arg3: memref<1x512xf32, #tpu.memory_space<vmem>>, %arg4: memref<128x128xf32, #tpu.memory_space<vmem>>, %arg5: memref<1x128xf32, #tpu.memory_space<vmem>>, %arg6: memref<8x128xf32, #tpu.memory_space<vmem>>, %arg7: memref<8x128xf32, #tpu.memory_space<vmem>>, %arg8: memref<64x128xf32, #tpu.memory_space<vmem>>, %arg9: memref<64x512xf32, #tpu.memory_space<vmem>>, %arg10: memref<64x128xf32, #tpu.memory_space<vmem>>) attributes {dimension_semantics = [], scalar_prefetch = 0 : i64, scratch_operands = 2 : i64, tpu.core_type = #tpu.core_type<tc>} {
    %c0 = arith.constant 0 : index
    %c0_0 = arith.constant 0 : index
    %0 = vector.load %arg0[%c0, %c0_0] : memref<64x9xf32, #tpu.memory_space<vmem>>, vector<64x9xf32>
    %c0_1 = arith.constant 0 : index
    %c0_2 = arith.constant 0 : index
    %1 = vector.load %arg1[%c0_1, %c0_2] : memref<9x512xf32, #tpu.memory_space<vmem>>, vector<9x512xf32>
    %cst = arith.constant dense<0.000000e+00> : vector<64x512xf32>
    %2 = tpu.matmul %0, %1, %cst {dimension_numbers = #tpu.dot_dimension_numbers<[1], [0], [0], [1], [0, 0, 1, 1], [], []>} : vector<64x9xf32>, vector<9x512xf32>, vector<64x512xf32> -> vector<64x512xf32>
    %c0_3 = arith.constant 0 : index
    %c0_4 = arith.constant 0 : index
    %3 = vector.load %arg3[%c0_3, %c0_4] : memref<1x512xf32, #tpu.memory_space<vmem>>, vector<1x512xf32>
    %4 = vector.broadcast %3 : vector<1x512xf32> to vector<64x512xf32>
    %5 = arith.addf %2, %4 : vector<64x512xf32>
    %c0_5 = arith.constant 0 : index
    %c0_6 = arith.constant 0 : index
    %6 = vector.load %arg9[%c0_5, %c0_6] : memref<64x512xf32, #tpu.memory_space<vmem>>, vector<64x512xf32>
    tpu.vector_store %arg9[%c0_5, %c0_6], %5 {strides = array<i32>} : memref<64x512xf32, #tpu.memory_space<vmem>>, vector<64x512xf32>,
    %c0_7 = arith.constant 0 : index
    %c0_8 = arith.constant 0 : index
    %7 = vector.load %arg2[%c0_7, %c0_8] : memref<128x512xf32, #tpu.memory_space<vmem>>, vector<128x512xf32>
    %c0_9 = arith.constant 0 : index
    %c0_10 = arith.constant 0 : index
    %8 = vector.load %arg6[%c0_9, %c0_10] : memref<8x128xf32, #tpu.memory_space<vmem>>, vector<8x128xf32>
    %c0_11 = arith.constant 0 : index
    %c0_12 = arith.constant 0 : index
    %9 = vector.load %arg7[%c0_11, %c0_12] : memref<8x128xf32, #tpu.memory_space<vmem>>, vector<8x128xf32>
    %c0_13 = arith.constant 0 : index
    %c0_14 = arith.constant 0 : index
    %10 = vector.load %arg9[%c0_13, %c0_14] : memref<64x512xf32, #tpu.memory_space<vmem>>, vector<8x512xf32>
    %cst_15 = arith.constant dense<0.000000e+00> : vector<8x512xf32>
    %11 = tpu.matmul %8, %7, %cst_15 {dimension_numbers = #tpu.dot_dimension_numbers<[1], [0], [0], [1], [0, 0, 1, 1], [], []>} : vector<8x128xf32>, vector<128x512xf32>, vector<8x512xf32> -> vector<8x512xf32>
    %12 = arith.addf %10, %11 : vector<8x512xf32>
    %13 = vector.extract_strided_slice %12 {offsets = [0, 0], sizes = [8, 384], strides = [1, 1]} : vector<8x512xf32> to vector<8x384xf32>
    %cst_16 = arith.constant 5.000000e-01 : f32
    %14 = vector.broadcast %cst_16 : f32 to vector<8x384xf32>
    %15 = arith.mulf %14, %13 : vector<8x384xf32>
    %16 = math.tanh %15 : vector<8x384xf32>
    %cst_17 = arith.constant 5.000000e-01 : f32
    %17 = vector.broadcast %cst_17 : f32 to vector<8x384xf32>
    %18 = arith.mulf %17, %16 : vector<8x384xf32>
    %cst_18 = arith.constant 5.000000e-01 : f32
    %19 = vector.broadcast %cst_18 : f32 to vector<8x384xf32>
    %20 = arith.addf %18, %19 : vector<8x384xf32>
    %21 = vector.extract_strided_slice %20 {offsets = [0, 0], sizes = [8, 128], strides = [1, 1]} : vector<8x384xf32> to vector<8x128xf32>
    %22 = vector.extract_strided_slice %20 {offsets = [0, 128], sizes = [8, 128], strides = [1, 1]} : vector<8x384xf32> to vector<8x128xf32>
    %23 = vector.extract_strided_slice %20 {offsets = [0, 256], sizes = [8, 128], strides = [1, 1]} : vector<8x384xf32> to vector<8x128xf32>
    %24 = vector.extract_strided_slice %12 {offsets = [0, 384], sizes = [8, 128], strides = [1, 1]} : vector<8x512xf32> to vector<8x128xf32>
    %25 = math.tanh %24 : vector<8x128xf32>
    %26 = arith.mulf %22, %9 : vector<8x128xf32>
    %27 = arith.mulf %21, %25 : vector<8x128xf32>
    %28 = arith.addf %26, %27 : vector<8x128xf32>
    %29 = math.tanh %28 : vector<8x128xf32>
    %30 = arith.mulf %23, %29 : vector<8x128xf32>
    %c0_19 = arith.constant 0 : index
    %c0_20 = arith.constant 0 : index
    %31 = vector.load %arg10[%c0_19, %c0_20] : memref<64x128xf32, #tpu.memory_space<vmem>>, vector<8x128xf32>
    tpu.vector_store %arg10[%c0_19, %c0_20], %30 {strides = array<i32>} : memref<64x128xf32, #tpu.memory_space<vmem>>, vector<8x128xf32>,
    %c8 = arith.constant 8 : index
    %c0_21 = arith.constant 0 : index
    %32 = vector.load %arg9[%c8, %c0_21] : memref<64x512xf32, #tpu.memory_space<vmem>>, vector<8x512xf32>
    %cst_22 = arith.constant dense<0.000000e+00> : vector<8x512xf32>
    %33 = tpu.matmul %30, %7, %cst_22 {dimension_numbers = #tpu.dot_dimension_numbers<[1], [0], [0], [1], [0, 0, 1, 1], [], []>} : vector<8x128xf32>, vector<128x512xf32>, vector<8x512xf32> -> vector<8x512xf32>
    %34 = arith.addf %32, %33 : vector<8x512xf32>
    %35 = vector.extract_strided_slice %34 {offsets = [0, 0], sizes = [8, 384], strides = [1, 1]} : vector<8x512xf32> to vector<8x384xf32>
    %cst_23 = arith.constant 5.000000e-01 : f32
    %36 = vector.broadcast %cst_23 : f32 to vector<8x384xf32>
    %37 = arith.mulf %36, %35 : vector<8x384xf32>
    %38 = math.tanh %37 : vector<8x384xf32>
    %cst_24 = arith.constant 5.000000e-01 : f32
    %39 = vector.broadcast %cst_24 : f32 to vector<8x384xf32>
    %40 = arith.mulf %39, %38 : vector<8x384xf32>
    %cst_25 = arith.constant 5.000000e-01 : f32
    %41 = vector.broadcast %cst_25 : f32 to vector<8x384xf32>
    %42 = arith.addf %40, %41 : vector<8x384xf32>
    %43 = vector.extract_strided_slice %42 {offsets = [0, 0], sizes = [8, 128], strides = [1, 1]} : vector<8x384xf32> to vector<8x128xf32>
    %44 = vector.extract_strided_slice %42 {offsets = [0, 128], sizes = [8, 128], strides = [1, 1]} : vector<8x384xf32> to vector<8x128xf32>
    %45 = vector.extract_strided_slice %42 {offsets = [0, 256], sizes = [8, 128], strides = [1, 1]} : vector<8x384xf32> to vector<8x128xf32>
    %46 = vector.extract_strided_slice %34 {offsets = [0, 384], sizes = [8, 128], strides = [1, 1]} : vector<8x512xf32> to vector<8x128xf32>
    %47 = math.tanh %46 : vector<8x128xf32>
    %48 = arith.mulf %44, %28 : vector<8x128xf32>
    %49 = arith.mulf %43, %47 : vector<8x128xf32>
    %50 = arith.addf %48, %49 : vector<8x128xf32>
    %51 = math.tanh %50 : vector<8x128xf32>
    %52 = arith.mulf %45, %51 : vector<8x128xf32>
    %c8_26 = arith.constant 8 : index
    %c0_27 = arith.constant 0 : index
    %53 = vector.load %arg10[%c8_26, %c0_27] : memref<64x128xf32, #tpu.memory_space<vmem>>, vector<8x128xf32>
    tpu.vector_store %arg10[%c8_26, %c0_27], %52 {strides = array<i32>} : memref<64x128xf32, #tpu.memory_space<vmem>>, vector<8x128xf32>,
    %c16 = arith.constant 16 : index
    %c0_28 = arith.constant 0 : index
    %54 = vector.load %arg9[%c16, %c0_28] : memref<64x512xf32, #tpu.memory_space<vmem>>, vector<8x512xf32>
    %cst_29 = arith.constant dense<0.000000e+00> : vector<8x512xf32>
    %55 = tpu.matmul %52, %7, %cst_29 {dimension_numbers = #tpu.dot_dimension_numbers<[1], [0], [0], [1], [0, 0, 1, 1], [], []>} : vector<8x128xf32>, vector<128x512xf32>, vector<8x512xf32> -> vector<8x512xf32>
    %56 = arith.addf %54, %55 : vector<8x512xf32>
    %57 = vector.extract_strided_slice %56 {offsets = [0, 0], sizes = [8, 384], strides = [1, 1]} : vector<8x512xf32> to vector<8x384xf32>
    %cst_30 = arith.constant 5.000000e-01 : f32
    %58 = vector.broadcast %cst_30 : f32 to vector<8x384xf32>
    %59 = arith.mulf %58, %57 : vector<8x384xf32>
    %60 = math.tanh %59 : vector<8x384xf32>
    %cst_31 = arith.constant 5.000000e-01 : f32
    %61 = vector.broadcast %cst_31 : f32 to vector<8x384xf32>
    %62 = arith.mulf %61, %60 : vector<8x384xf32>
    %cst_32 = arith.constant 5.000000e-01 : f32
    %63 = vector.broadcast %cst_32 : f32 to vector<8x384xf32>
    %64 = arith.addf %62, %63 : vector<8x384xf32>
    %65 = vector.extract_strided_slice %64 {offsets = [0, 0], sizes = [8, 128], strides = [1, 1]} : vector<8x384xf32> to vector<8x128xf32>
    %66 = vector.extract_strided_slice %64 {offsets = [0, 128], sizes = [8, 128], strides = [1, 1]} : vector<8x384xf32> to vector<8x128xf32>
    %67 = vector.extract_strided_slice %64 {offsets = [0, 256], sizes = [8, 128], strides = [1, 1]} : vector<8x384xf32> to vector<8x128xf32>
    %68 = vector.extract_strided_slice %56 {offsets = [0, 384], sizes = [8, 128], strides = [1, 1]} : vector<8x512xf32> to vector<8x128xf32>
    %69 = math.tanh %68 : vector<8x128xf32>
    %70 = arith.mulf %66, %50 : vector<8x128xf32>
    %71 = arith.mulf %65, %69 : vector<8x128xf32>
    %72 = arith.addf %70, %71 : vector<8x128xf32>
    %73 = math.tanh %72 : vector<8x128xf32>
    %74 = arith.mulf %67, %73 : vector<8x128xf32>
    %c16_33 = arith.constant 16 : index
    %c0_34 = arith.constant 0 : index
    %75 = vector.load %arg10[%c16_33, %c0_34] : memref<64x128xf32, #tpu.memory_space<vmem>>, vector<8x128xf32>
    tpu.vector_store %arg10[%c16_33, %c0_34], %74 {strides = array<i32>} : memref<64x128xf32, #tpu.memory_space<vmem>>, vector<8x128xf32>,
    %c24 = arith.constant 24 : index
    %c0_35 = arith.constant 0 : index
    %76 = vector.load %arg9[%c24, %c0_35] : memref<64x512xf32, #tpu.memory_space<vmem>>, vector<8x512xf32>
    %cst_36 = arith.constant dense<0.000000e+00> : vector<8x512xf32>
    %77 = tpu.matmul %74, %7, %cst_36 {dimension_numbers = #tpu.dot_dimension_numbers<[1], [0], [0], [1], [0, 0, 1, 1], [], []>} : vector<8x128xf32>, vector<128x512xf32>, vector<8x512xf32> -> vector<8x512xf32>
    %78 = arith.addf %76, %77 : vector<8x512xf32>
    %79 = vector.extract_strided_slice %78 {offsets = [0, 0], sizes = [8, 384], strides = [1, 1]} : vector<8x512xf32> to vector<8x384xf32>
    %cst_37 = arith.constant 5.000000e-01 : f32
    %80 = vector.broadcast %cst_37 : f32 to vector<8x384xf32>
    %81 = arith.mulf %80, %79 : vector<8x384xf32>
    %82 = math.tanh %81 : vector<8x384xf32>
    %cst_38 = arith.constant 5.000000e-01 : f32
    %83 = vector.broadcast %cst_38 : f32 to vector<8x384xf32>
    %84 = arith.mulf %83, %82 : vector<8x384xf32>
    %cst_39 = arith.constant 5.000000e-01 : f32
    %85 = vector.broadcast %cst_39 : f32 to vector<8x384xf32>
    %86 = arith.addf %84, %85 : vector<8x384xf32>
    %87 = vector.extract_strided_slice %86 {offsets = [0, 0], sizes = [8, 128], strides = [1, 1]} : vector<8x384xf32> to vector<8x128xf32>
    %88 = vector.extract_strided_slice %86 {offsets = [0, 128], sizes = [8, 128], strides = [1, 1]} : vector<8x384xf32> to vector<8x128xf32>
    %89 = vector.extract_strided_slice %86 {offsets = [0, 256], sizes = [8, 128], strides = [1, 1]} : vector<8x384xf32> to vector<8x128xf32>
    %90 = vector.extract_strided_slice %78 {offsets = [0, 384], sizes = [8, 128], strides = [1, 1]} : vector<8x512xf32> to vector<8x128xf32>
    %91 = math.tanh %90 : vector<8x128xf32>
    %92 = arith.mulf %88, %72 : vector<8x128xf32>
    %93 = arith.mulf %87, %91 : vector<8x128xf32>
    %94 = arith.addf %92, %93 : vector<8x128xf32>
    %95 = math.tanh %94 : vector<8x128xf32>
    %96 = arith.mulf %89, %95 : vector<8x128xf32>
    %c24_40 = arith.constant 24 : index
    %c0_41 = arith.constant 0 : index
    %97 = vector.load %arg10[%c24_40, %c0_41] : memref<64x128xf32, #tpu.memory_space<vmem>>, vector<8x128xf32>
    tpu.vector_store %arg10[%c24_40, %c0_41], %96 {strides = array<i32>} : memref<64x128xf32, #tpu.memory_space<vmem>>, vector<8x128xf32>,
    %c32 = arith.constant 32 : index
    %c0_42 = arith.constant 0 : index
    %98 = vector.load %arg9[%c32, %c0_42] : memref<64x512xf32, #tpu.memory_space<vmem>>, vector<8x512xf32>
    %cst_43 = arith.constant dense<0.000000e+00> : vector<8x512xf32>
    %99 = tpu.matmul %96, %7, %cst_43 {dimension_numbers = #tpu.dot_dimension_numbers<[1], [0], [0], [1], [0, 0, 1, 1], [], []>} : vector<8x128xf32>, vector<128x512xf32>, vector<8x512xf32> -> vector<8x512xf32>
    %100 = arith.addf %98, %99 : vector<8x512xf32>
    %101 = vector.extract_strided_slice %100 {offsets = [0, 0], sizes = [8, 384], strides = [1, 1]} : vector<8x512xf32> to vector<8x384xf32>
    %cst_44 = arith.constant 5.000000e-01 : f32
    %102 = vector.broadcast %cst_44 : f32 to vector<8x384xf32>
    %103 = arith.mulf %102, %101 : vector<8x384xf32>
    %104 = math.tanh %103 : vector<8x384xf32>
    %cst_45 = arith.constant 5.000000e-01 : f32
    %105 = vector.broadcast %cst_45 : f32 to vector<8x384xf32>
    %106 = arith.mulf %105, %104 : vector<8x384xf32>
    %cst_46 = arith.constant 5.000000e-01 : f32
    %107 = vector.broadcast %cst_46 : f32 to vector<8x384xf32>
    %108 = arith.addf %106, %107 : vector<8x384xf32>
    %109 = vector.extract_strided_slice %108 {offsets = [0, 0], sizes = [8, 128], strides = [1, 1]} : vector<8x384xf32> to vector<8x128xf32>
    %110 = vector.extract_strided_slice %108 {offsets = [0, 128], sizes = [8, 128], strides = [1, 1]} : vector<8x384xf32> to vector<8x128xf32>
    %111 = vector.extract_strided_slice %108 {offsets = [0, 256], sizes = [8, 128], strides = [1, 1]} : vector<8x384xf32> to vector<8x128xf32>
    %112 = vector.extract_strided_slice %100 {offsets = [0, 384], sizes = [8, 128], strides = [1, 1]} : vector<8x512xf32> to vector<8x128xf32>
    %113 = math.tanh %112 : vector<8x128xf32>
    %114 = arith.mulf %110, %94 : vector<8x128xf32>
    %115 = arith.mulf %109, %113 : vector<8x128xf32>
    %116 = arith.addf %114, %115 : vector<8x128xf32>
    %117 = math.tanh %116 : vector<8x128xf32>
    %118 = arith.mulf %111, %117 : vector<8x128xf32>
    %c32_47 = arith.constant 32 : index
    %c0_48 = arith.constant 0 : index
    %119 = vector.load %arg10[%c32_47, %c0_48] : memref<64x128xf32, #tpu.memory_space<vmem>>, vector<8x128xf32>
    tpu.vector_store %arg10[%c32_47, %c0_48], %118 {strides = array<i32>} : memref<64x128xf32, #tpu.memory_space<vmem>>, vector<8x128xf32>,
    %c40 = arith.constant 40 : index
    %c0_49 = arith.constant 0 : index
    %120 = vector.load %arg9[%c40, %c0_49] : memref<64x512xf32, #tpu.memory_space<vmem>>, vector<8x512xf32>
    %cst_50 = arith.constant dense<0.000000e+00> : vector<8x512xf32>
    %121 = tpu.matmul %118, %7, %cst_50 {dimension_numbers = #tpu.dot_dimension_numbers<[1], [0], [0], [1], [0, 0, 1, 1], [], []>} : vector<8x128xf32>, vector<128x512xf32>, vector<8x512xf32> -> vector<8x512xf32>
    %122 = arith.addf %120, %121 : vector<8x512xf32>
    %123 = vector.extract_strided_slice %122 {offsets = [0, 0], sizes = [8, 384], strides = [1, 1]} : vector<8x512xf32> to vector<8x384xf32>
    %cst_51 = arith.constant 5.000000e-01 : f32
    %124 = vector.broadcast %cst_51 : f32 to vector<8x384xf32>
    %125 = arith.mulf %124, %123 : vector<8x384xf32>
    %126 = math.tanh %125 : vector<8x384xf32>
    %cst_52 = arith.constant 5.000000e-01 : f32
    %127 = vector.broadcast %cst_52 : f32 to vector<8x384xf32>
    %128 = arith.mulf %127, %126 : vector<8x384xf32>
    %cst_53 = arith.constant 5.000000e-01 : f32
    %129 = vector.broadcast %cst_53 : f32 to vector<8x384xf32>
    %130 = arith.addf %128, %129 : vector<8x384xf32>
    %131 = vector.extract_strided_slice %130 {offsets = [0, 0], sizes = [8, 128], strides = [1, 1]} : vector<8x384xf32> to vector<8x128xf32>
    %132 = vector.extract_strided_slice %130 {offsets = [0, 128], sizes = [8, 128], strides = [1, 1]} : vector<8x384xf32> to vector<8x128xf32>
    %133 = vector.extract_strided_slice %130 {offsets = [0, 256], sizes = [8, 128], strides = [1, 1]} : vector<8x384xf32> to vector<8x128xf32>
    %134 = vector.extract_strided_slice %122 {offsets = [0, 384], sizes = [8, 128], strides = [1, 1]} : vector<8x512xf32> to vector<8x128xf32>
    %135 = math.tanh %134 : vector<8x128xf32>
    %136 = arith.mulf %132, %116 : vector<8x128xf32>
    %137 = arith.mulf %131, %135 : vector<8x128xf32>
    %138 = arith.addf %136, %137 : vector<8x128xf32>
    %139 = math.tanh %138 : vector<8x128xf32>
    %140 = arith.mulf %133, %139 : vector<8x128xf32>
    %c40_54 = arith.constant 40 : index
    %c0_55 = arith.constant 0 : index
    %141 = vector.load %arg10[%c40_54, %c0_55] : memref<64x128xf32, #tpu.memory_space<vmem>>, vector<8x128xf32>
    tpu.vector_store %arg10[%c40_54, %c0_55], %140 {strides = array<i32>} : memref<64x128xf32, #tpu.memory_space<vmem>>, vector<8x128xf32>,
    %c48 = arith.constant 48 : index
    %c0_56 = arith.constant 0 : index
    %142 = vector.load %arg9[%c48, %c0_56] : memref<64x512xf32, #tpu.memory_space<vmem>>, vector<8x512xf32>
    %cst_57 = arith.constant dense<0.000000e+00> : vector<8x512xf32>
    %143 = tpu.matmul %140, %7, %cst_57 {dimension_numbers = #tpu.dot_dimension_numbers<[1], [0], [0], [1], [0, 0, 1, 1], [], []>} : vector<8x128xf32>, vector<128x512xf32>, vector<8x512xf32> -> vector<8x512xf32>
    %144 = arith.addf %142, %143 : vector<8x512xf32>
    %145 = vector.extract_strided_slice %144 {offsets = [0, 0], sizes = [8, 384], strides = [1, 1]} : vector<8x512xf32> to vector<8x384xf32>
    %cst_58 = arith.constant 5.000000e-01 : f32
    %146 = vector.broadcast %cst_58 : f32 to vector<8x384xf32>
    %147 = arith.mulf %146, %145 : vector<8x384xf32>
    %148 = math.tanh %147 : vector<8x384xf32>
    %cst_59 = arith.constant 5.000000e-01 : f32
    %149 = vector.broadcast %cst_59 : f32 to vector<8x384xf32>
    %150 = arith.mulf %149, %148 : vector<8x384xf32>
    %cst_60 = arith.constant 5.000000e-01 : f32
    %151 = vector.broadcast %cst_60 : f32 to vector<8x384xf32>
    %152 = arith.addf %150, %151 : vector<8x384xf32>
    %153 = vector.extract_strided_slice %152 {offsets = [0, 0], sizes = [8, 128], strides = [1, 1]} : vector<8x384xf32> to vector<8x128xf32>
    %154 = vector.extract_strided_slice %152 {offsets = [0, 128], sizes = [8, 128], strides = [1, 1]} : vector<8x384xf32> to vector<8x128xf32>
    %155 = vector.extract_strided_slice %152 {offsets = [0, 256], sizes = [8, 128], strides = [1, 1]} : vector<8x384xf32> to vector<8x128xf32>
    %156 = vector.extract_strided_slice %144 {offsets = [0, 384], sizes = [8, 128], strides = [1, 1]} : vector<8x512xf32> to vector<8x128xf32>
    %157 = math.tanh %156 : vector<8x128xf32>
    %158 = arith.mulf %154, %138 : vector<8x128xf32>
    %159 = arith.mulf %153, %157 : vector<8x128xf32>
    %160 = arith.addf %158, %159 : vector<8x128xf32>
    %161 = math.tanh %160 : vector<8x128xf32>
    %162 = arith.mulf %155, %161 : vector<8x128xf32>
    %c48_61 = arith.constant 48 : index
    %c0_62 = arith.constant 0 : index
    %163 = vector.load %arg10[%c48_61, %c0_62] : memref<64x128xf32, #tpu.memory_space<vmem>>, vector<8x128xf32>
    tpu.vector_store %arg10[%c48_61, %c0_62], %162 {strides = array<i32>} : memref<64x128xf32, #tpu.memory_space<vmem>>, vector<8x128xf32>,
    %c56 = arith.constant 56 : index
    %c0_63 = arith.constant 0 : index
    %164 = vector.load %arg9[%c56, %c0_63] : memref<64x512xf32, #tpu.memory_space<vmem>>, vector<8x512xf32>
    %cst_64 = arith.constant dense<0.000000e+00> : vector<8x512xf32>
    %165 = tpu.matmul %162, %7, %cst_64 {dimension_numbers = #tpu.dot_dimension_numbers<[1], [0], [0], [1], [0, 0, 1, 1], [], []>} : vector<8x128xf32>, vector<128x512xf32>, vector<8x512xf32> -> vector<8x512xf32>
    %166 = arith.addf %164, %165 : vector<8x512xf32>
    %167 = vector.extract_strided_slice %166 {offsets = [0, 0], sizes = [8, 384], strides = [1, 1]} : vector<8x512xf32> to vector<8x384xf32>
    %cst_65 = arith.constant 5.000000e-01 : f32
    %168 = vector.broadcast %cst_65 : f32 to vector<8x384xf32>
    %169 = arith.mulf %168, %167 : vector<8x384xf32>
    %170 = math.tanh %169 : vector<8x384xf32>
    %cst_66 = arith.constant 5.000000e-01 : f32
    %171 = vector.broadcast %cst_66 : f32 to vector<8x384xf32>
    %172 = arith.mulf %171, %170 : vector<8x384xf32>
    %cst_67 = arith.constant 5.000000e-01 : f32
    %173 = vector.broadcast %cst_67 : f32 to vector<8x384xf32>
    %174 = arith.addf %172, %173 : vector<8x384xf32>
    %175 = vector.extract_strided_slice %174 {offsets = [0, 0], sizes = [8, 128], strides = [1, 1]} : vector<8x384xf32> to vector<8x128xf32>
    %176 = vector.extract_strided_slice %174 {offsets = [0, 128], sizes = [8, 128], strides = [1, 1]} : vector<8x384xf32> to vector<8x128xf32>
    %177 = vector.extract_strided_slice %174 {offsets = [0, 256], sizes = [8, 128], strides = [1, 1]} : vector<8x384xf32> to vector<8x128xf32>
    %178 = vector.extract_strided_slice %166 {offsets = [0, 384], sizes = [8, 128], strides = [1, 1]} : vector<8x512xf32> to vector<8x128xf32>
    %179 = math.tanh %178 : vector<8x128xf32>
    %180 = arith.mulf %176, %160 : vector<8x128xf32>
    %181 = arith.mulf %175, %179 : vector<8x128xf32>
    %182 = arith.addf %180, %181 : vector<8x128xf32>
    %183 = math.tanh %182 : vector<8x128xf32>
    %184 = arith.mulf %177, %183 : vector<8x128xf32>
    %c56_68 = arith.constant 56 : index
    %c0_69 = arith.constant 0 : index
    %185 = vector.load %arg10[%c56_68, %c0_69] : memref<64x128xf32, #tpu.memory_space<vmem>>, vector<8x128xf32>
    tpu.vector_store %arg10[%c56_68, %c0_69], %184 {strides = array<i32>} : memref<64x128xf32, #tpu.memory_space<vmem>>, vector<8x128xf32>,
    %c0_70 = arith.constant 0 : index
    %c0_71 = arith.constant 0 : index
    %186 = vector.load %arg10[%c0_70, %c0_71] : memref<64x128xf32, #tpu.memory_space<vmem>>, vector<64x128xf32>
    %c0_72 = arith.constant 0 : index
    %c0_73 = arith.constant 0 : index
    %187 = vector.load %arg4[%c0_72, %c0_73] : memref<128x128xf32, #tpu.memory_space<vmem>>, vector<128x128xf32>
    %cst_74 = arith.constant dense<0.000000e+00> : vector<64x128xf32>
    %188 = tpu.matmul %186, %187, %cst_74 {dimension_numbers = #tpu.dot_dimension_numbers<[1], [0], [0], [1], [0, 0, 1, 1], [], []>} : vector<64x128xf32>, vector<128x128xf32>, vector<64x128xf32> -> vector<64x128xf32>
    %c0_75 = arith.constant 0 : index
    %c0_76 = arith.constant 0 : index
    %189 = vector.load %arg5[%c0_75, %c0_76] : memref<1x128xf32, #tpu.memory_space<vmem>>, vector<1x128xf32>
    %190 = vector.broadcast %189 : vector<1x128xf32> to vector<64x128xf32>
    %191 = arith.addf %188, %190 : vector<64x128xf32>
    %c0_77 = arith.constant 0 : index
    %c0_78 = arith.constant 0 : index
    %192 = vector.load %arg8[%c0_77, %c0_78] : memref<64x128xf32, #tpu.memory_space<vmem>>, vector<64x128xf32>
    tpu.vector_store %arg8[%c0_77, %c0_78], %191 {strides = array<i32>} : memref<64x128xf32, #tpu.memory_space<vmem>>, vector<64x128xf32>,
    return
  }
}

</mosaic_0001>

<llo_original>
// kernel: vanilla_lstm_forward.1
$region0: #{vanilla_lstm_forward.1}
  #allocation0 [shape = 'u32[]', space=smem, size = 0x4, offset = 0x4, fixed_abs, tag = 'smem constant byte address 0x4 - core index']
  #allocation1 [shape = 'u32[144,128]{1,0:T(1,128)}', space=vmem, size = 0x12000, scoped, tag = 'internal scratch']
  #allocation2 [shape = 'f32[64,512]{1,0:T(8,128)}', space=vmem, size = 0x20000, scoped, tag = 'scratch operand']
  #allocation3 [shape = 'f32[64,128]{1,0:T(8,128)}', space=vmem, size = 0x8000, scoped, tag = 'scratch operand']
  %s0 = inlined_call_operand.vmem [shape: f32[64,9], index: 0, kind: input, shape index: {}]
  %s1 = inlined_call_operand.vmem [shape: f32[9,512], index: 1, kind: input, shape index: {}]
  %s2 = inlined_call_operand.vmem [shape: f32[128,512], index: 2, kind: input, shape index: {}]
  %s3 = inlined_call_operand.vmem [shape: f32[1,512], index: 3, kind: input, shape index: {}]
  %s4 = inlined_call_operand.vmem [shape: f32[128,128], index: 4, kind: input, shape index: {}]
  %s5 = inlined_call_operand.vmem [shape: f32[1,128], index: 5, kind: input, shape index: {}]
  %s6 = inlined_call_operand.vmem [shape: f32[8,128], index: 6, kind: input, shape index: {}]
  %s7 = inlined_call_operand.vmem [shape: f32[8,128], index: 7, kind: input, shape index: {}]
  %s8 = inlined_call_operand.vmem [shape: f32[64,128], index: 8, kind: output, shape index: {}]
  %s9 = sld [smem:[#allocation0]]
  $region42: #{vanilla_lstm_forward.1} parent=0
    _
  %s11 = ssub.s32 1, %s9
  %s12 = scalar_select 0, %s11, %s9
  // Predicated region
  $region2: #{vanilla_lstm_forward.1} parent=0 // pred_check
    _
  $region3: #{vanilla_lstm_forward.1} parent=0 // pred_check_branch
    %14 = sbr.rel (0) target = $region5
  $region4: #{vanilla_lstm_forward.1} parent=0 // pred_region
    _
  $region5: #{vanilla_lstm_forward.1} parent=0 // pred_fallthru
    _
  // Predicated region
  $region6: #{vanilla_lstm_forward.1} parent=0 // pred_check
    _
  $region7: #{vanilla_lstm_forward.1} parent=0 // pred_check_branch
    %16 = sbr.rel (0) target = $region9
  $region8: #{vanilla_lstm_forward.1} parent=0 // pred_region
    _
  $region9: #{vanilla_lstm_forward.1} parent=0 // pred_fallthru
    _
  // Predicated region
  $region10: #{vanilla_lstm_forward.1} parent=0 // pred_check
    _
  $region11: #{vanilla_lstm_forward.1} parent=0 // pred_check_branch
    %18 = sbr.rel (0) target = $region13
  $region12: #{vanilla_lstm_forward.1} parent=0 // pred_region
    _
  $region13: #{vanilla_lstm_forward.1} parent=0 // pred_fallthru
    _
  // Predicated region
  $region14: #{vanilla_lstm_forward.1} parent=0 // pred_check
    _
  $region15: #{vanilla_lstm_forward.1} parent=0 // pred_check_branch
    %20 = sbr.rel (0) target = $region17
  $region16: #{vanilla_lstm_forward.1} parent=0 // pred_region
    _
  $region17: #{vanilla_lstm_forward.1} parent=0 // pred_fallthru
    _
  // Predicated region
  $region18: #{vanilla_lstm_forward.1} parent=0 // pred_check
    _
  $region19: #{vanilla_lstm_forward.1} parent=0 // pred_check_branch
    %22 = sbr.rel (0) target = $region21
  $region20: #{vanilla_lstm_forward.1} parent=0 // pred_region
    _
  $region21: #{vanilla_lstm_forward.1} parent=0 // pred_fallthru
    _
  // Predicated region
  $region22: #{vanilla_lstm_forward.1} parent=0 // pred_check
    _
  $region23: #{vanilla_lstm_forward.1} parent=0 // pred_check_branch
    %24 = sbr.rel (0) target = $region25
  $region24: #{vanilla_lstm_forward.1} parent=0 // pred_region
    _
  $region25: #{vanilla_lstm_forward.1} parent=0 // pred_fallthru
    _
  // Predicated region
  $region26: #{vanilla_lstm_forward.1} parent=0 // pred_check
    _
  $region27: #{vanilla_lstm_forward.1} parent=0 // pred_check_branch
    %26 = sbr.rel (0) target = $region29
  $region28: #{vanilla_lstm_forward.1} parent=0 // pred_region
    _
  $region29: #{vanilla_lstm_forward.1} parent=0 // pred_fallthru
    _
  // Predicated region
  $region30: #{vanilla_lstm_forward.1} parent=0 // pred_check
    _
  $region31: #{vanilla_lstm_forward.1} parent=0 // pred_check_branch
    %28 = sbr.rel (0) target = $region33
  $region32: #{vanilla_lstm_forward.1} parent=0 // pred_region
    _
  $region33: #{vanilla_lstm_forward.1} parent=0 // pred_fallthru
    _
  %v29 = vld [vmem:[%s0] sm:$0xff]
  %v30 = vld [vmem:[%s0 + $0x8] sm:$0xff]
  %v31 = vld [vmem:[%s0 + $0x10] sm:$0xff]
  %v32 = vld [vmem:[%s0 + $0x18] sm:$0xff]
  %v33 = vld [vmem:[%s0 + $0x20] sm:$0xff]
  %v34 = vld [vmem:[%s0 + $0x28] sm:$0xff]
  %v35 = vld [vmem:[%s0 + $0x30] sm:$0xff]
  %v36 = vld [vmem:[%s0 + $0x38] sm:$0xff]
  %v37 = vld [vmem:[%s1] sm:$0xff]
  %v38 = vld [vmem:[%s1 + $0x8] sm:$0xff]
  %v39 = vld [vmem:[%s1 + $0x10] sm:$0xff]
  %v40 = vld [vmem:[%s1 + $0x18] sm:$0xff]
  %v41 = vld [vmem:[%s1 + $0x20] sm:$0x1]
  %v42 = vld [vmem:[%s1 + $0x28] sm:$0x1]
  %v43 = vld [vmem:[%s1 + $0x30] sm:$0x1]
  %v44 = vld [vmem:[%s1 + $0x38] sm:$0x1]
  %v45 = vld [vmem:[%s3] sm:$0xf]
  %v47 = vlaneseq
  %v48 = vshrl.u32 %v47, 7
  %v49 = vsub.s32 0, %v48
  %v50 = vrot.slane %v45, %v49
  %v51 = vlaneseq
  %v52 = vshrl.u32 %v51, 7
  %v53 = vsub.s32 1, %v52
  %v54 = vrot.slane %v45, %v53
  %v55 = vlaneseq
  %v56 = vshrl.u32 %v55, 7
  %v57 = vsub.s32 2, %v56
  %v58 = vrot.slane %v45, %v57
  %v59 = vlaneseq
  %v60 = vshrl.u32 %v59, 7
  %v61 = vsub.s32 3, %v60
  %v62 = vrot.slane %v45, %v61
  %vm67 = vcmask 72704
  %v69 = vsel %vm67, %v29, 0
  %v72 = vsel %vm67, %v30, 0
  %v75 = vsel %vm67, %v31, 0
  %v78 = vsel %vm67, %v32, 0
  %v81 = vsel %vm67, %v33, 0
  %v84 = vsel %vm67, %v34, 0
  %v87 = vsel %vm67, %v35, 0
  %v90 = vsel %vm67, %v36, 0
  %vm92 = vcmask 1040384
  %v94 = vsel %vm92, %v41, 0
  %v97 = vsel %vm92, %v42, 0
  %v100 = vsel %vm92, %v43, 0
  %v103 = vsel %vm92, %v44, 0
  %105 = vmatprep.subr.mxu0 %v38
  %106 = vmatpush1.msra.mxu0 %v37
  %107 = vmatprep.subr.mxu0 %v97
  %108 = vmatpush1.msra.mxu0 %v94
  %109 = vmatprep.subr.mxu0 0.0
  %110 = vmatpush1.msra.mxu0 0.0
  %111 = vmatprep.subr.mxu0 0.0
  %112 = vmatpush1.msra.mxu0 0.0
  %113 = vmatprep.subr.mxu0 0.0
  %114 = vmatpush1.msra.mxu0 0.0
  %115 = vmatprep.subr.mxu0 0.0
  %116 = vmatpush1.msra.mxu0 0.0
  %117 = vmatprep.subr.mxu0 0.0
  %118 = vmatpush1.msra.mxu0 0.0
  %119 = vmatprep.subr.mxu0 0.0
  %120 = vmatpush1.msra.mxu0 0.0
  %121 = vmatprep.subr.mxu0 0.0
  %122 = vmatpush1.msra.mxu0 0.0
  %123 = vmatprep.subr.mxu0 0.0
  %124 = vmatpush1.msra.mxu0 0.0
  %125 = vmatprep.subr.mxu0 0.0
  %126 = vmatpush1.msra.mxu0 0.0
  %127 = vmatprep.subr.mxu0 0.0
  %128 = vmatpush1.msra.mxu0 0.0
  %129 = vmatprep.subr.mxu0 0.0
  %130 = vmatpush1.msra.mxu0 0.0
  %131 = vmatprep.subr.mxu0 0.0
  %132 = vmatpush1.msra.mxu0 0.0
  %133 = vmatprep.subr.mxu0 0.0
  %134 = vmatpush1.msra.mxu0 0.0
  %135 = vmatprep.subr.mxu0 0.0
  %136 = vmatpush1.msra.mxu0 0.0
  %137 = vmatprep.subr.mxu0 0.0
  %138 = vmatpush1.msra.mxu0 0.0
  %139 = vmatprep.subr.mxu0 0.0
  %140 = vmatpush1.msra.mxu0 0.0
  %141 = vmatprep.subr.mxu0 0.0
  %142 = vmatpush1.msra.mxu0 0.0
  %143 = vmatprep.subr.mxu0 0.0
  %144 = vmatpush1.msra.mxu0 0.0
  %145 = vmatprep.subr.mxu0 0.0
  %146 = vmatpush1.msra.mxu0 0.0
  %147 = vmatprep.subr.mxu0 0.0
  %148 = vmatpush1.msra.mxu0 0.0
  %149 = vmatprep.subr.mxu0 0.0
  %150 = vmatpush1.msra.mxu0 0.0
  %151 = vmatprep.subr.mxu0 0.0
  %152 = vmatpush1.msra.mxu0 0.0
  %153 = vmatprep.subr.mxu0 0.0
  %154 = vmatpush1.msra.mxu0 0.0
  %155 = vmatprep.subr.mxu0 0.0
  %156 = vmatpush1.msra.mxu0 0.0
  %157 = vmatprep.subr.mxu0 0.0
  %158 = vmatpush1.msra.mxu0 0.0
  %159 = vmatprep.subr.mxu0 0.0
  %160 = vmatpush1.msra.mxu0 0.0
  %161 = vmatprep.subr.mxu0 0.0
  %162 = vmatpush1.msra.mxu0 0.0
  %163 = vmatprep.subr.mxu0 0.0
  %164 = vmatpush1.msra.mxu0 0.0
  %165 = vmatprep.subr.mxu0 0.0
  %166 = vmatpush1.msra.mxu0 0.0
  %167 = vmatprep.subr.mxu0 0.0
  %168 = vmatpush1.msra.mxu0 0.0
  %169 = vmatprep.mubr.f32.mxu0 0.0
  %170 = vmatmul.mubr.f32.gmra.mrb[0].mxu0 %v69
  %v171 = vpop.f32.mrb[0].mxu0
  %v172 = vadd.f32 %v50, %v171
  %v173 = vpop.f32.mrb[0].mxu0
  %v174 = vadd.f32 %v54, %v173
  %175 = vmatprep.mubr.f32.mxu0 0.0
  %176 = vmatmul.mubr.f32.gmra.mrb[0].mxu0 %v72
  %v177 = vpop.f32.mrb[0].mxu0
  %v178 = vadd.f32 %v50, %v177
  %v179 = vpop.f32.mrb[0].mxu0
  %v180 = vadd.f32 %v54, %v179
  %181 = vmatprep.mubr.f32.mxu0 0.0
  %182 = vmatmul.mubr.f32.gmra.mrb[0].mxu0 %v75
  %v183 = vpop.f32.mrb[0].mxu0
  %v184 = vadd.f32 %v50, %v183
  %v185 = vpop.f32.mrb[0].mxu0
  %v186 = vadd.f32 %v54, %v185
  %187 = vmatprep.mubr.f32.mxu0 0.0
  %188 = vmatmul.mubr.f32.gmra.mrb[0].mxu0 %v78
  %v189 = vpop.f32.mrb[0].mxu0
  %v190 = vadd.f32 %v50, %v189
  %v191 = vpop.f32.mrb[0].mxu0
  %v192 = vadd.f32 %v54, %v191
  %193 = vmatprep.mubr.f32.mxu0 0.0
  %194 = vmatmul.mubr.f32.gmra.mrb[0].mxu0 %v81
  %v195 = vpop.f32.mrb[0].mxu0
  %v196 = vadd.f32 %v50, %v195
  %v197 = vpop.f32.mrb[0].mxu0
  %v198 = vadd.f32 %v54, %v197
  %199 = vmatprep.mubr.f32.mxu0 0.0
  %200 = vmatmul.mubr.f32.gmra.mrb[0].mxu0 %v84
  %v201 = vpop.f32.mrb[0].mxu0
  %v202 = vadd.f32 %v50, %v201
  %v203 = vpop.f32.mrb[0].mxu0
  %v204 = vadd.f32 %v54, %v203
  %205 = vmatprep.mubr.f32.mxu0 0.0
  %206 = vmatmul.mubr.f32.gmra.mrb[0].mxu0 %v87
  %v207 = vpop.f32.mrb[0].mxu0
  %v208 = vadd.f32 %v50, %v207
  %v209 = vpop.f32.mrb[0].mxu0
  %v210 = vadd.f32 %v54, %v209
  %211 = vmatprep.mubr.f32.mxu0 0.0
  %212 = vmatmul.mubr.f32.gmra.mrb[0].mxu0 %v90
  %v213 = vpop.f32.mrb[0].mxu0
  %v214 = vadd.f32 %v50, %v213
  %v215 = vpop.f32.mrb[0].mxu0
  %v216 = vadd.f32 %v54, %v215
  %217 = vdwg.mxu0
  %218 = vmatprep.subr.mxu0 %v40
  %219 = vmatpush1.msra.mxu0 %v39
  %220 = vmatprep.subr.mxu0 %v103
  %221 = vmatpush1.msra.mxu0 %v100
  %222 = vmatprep.subr.mxu0 0.0
  %223 = vmatpush1.msra.mxu0 0.0
  %224 = vmatprep.subr.mxu0 0.0
  %225 = vmatpush1.msra.mxu0 0.0
  %226 = vmatprep.subr.mxu0 0.0
  %227 = vmatpush1.msra.mxu0 0.0
  %228 = vmatprep.subr.mxu0 0.0
  %229 = vmatpush1.msra.mxu0 0.0
  %230 = vmatprep.subr.mxu0 0.0
  %231 = vmatpush1.msra.mxu0 0.0
  %232 = vmatprep.subr.mxu0 0.0
  %233 = vmatpush1.msra.mxu0 0.0
  %234 = vmatprep.subr.mxu0 0.0
  %235 = vmatpush1.msra.mxu0 0.0
  %236 = vmatprep.subr.mxu0 0.0
  %237 = vmatpush1.msra.mxu0 0.0
  %238 = vmatprep.subr.mxu0 0.0
  %239 = vmatpush1.msra.mxu0 0.0
  %240 = vmatprep.subr.mxu0 0.0
  %241 = vmatpush1.msra.mxu0 0.0
  %242 = vmatprep.subr.mxu0 0.0
  %243 = vmatpush1.msra.mxu0 0.0
  %244 = vmatprep.subr.mxu0 0.0
  %245 = vmatpush1.msra.mxu0 0.0
  %246 = vmatprep.subr.mxu0 0.0
  %247 = vmatpush1.msra.mxu0 0.0
  %248 = vmatprep.subr.mxu0 0.0
  %249 = vmatpush1.msra.mxu0 0.0
  %250 = vmatprep.subr.mxu0 0.0
  %251 = vmatpush1.msra.mxu0 0.0
  %252 = vmatprep.subr.mxu0 0.0
  %253 = vmatpush1.msra.mxu0 0.0
  %254 = vmatprep.subr.mxu0 0.0
  %255 = vmatpush1.msra.mxu0 0.0
  %256 = vmatprep.subr.mxu0 0.0
  %257 = vmatpush1.msra.mxu0 0.0
  %258 = vmatprep.subr.mxu0 0.0
  %259 = vmatpush1.msra.mxu0 0.0
  %260 = vmatprep.subr.mxu0 0.0
  %261 = vmatpush1.msra.mxu0 0.0
  %262 = vmatprep.subr.mxu0 0.0
  %263 = vmatpush1.msra.mxu0 0.0
  %264 = vmatprep.subr.mxu0 0.0
  %265 = vmatpush1.msra.mxu0 0.0
  %266 = vmatprep.subr.mxu0 0.0
  %267 = vmatpush1.msra.mxu0 0.0
  %268 = vmatprep.subr.mxu0 0.0
  %269 = vmatpush1.msra.mxu0 0.0
  %270 = vmatprep.subr.mxu0 0.0
  %271 = vmatpush1.msra.mxu0 0.0
  %272 = vmatprep.subr.mxu0 0.0
  %273 = vmatpush1.msra.mxu0 0.0
  %274 = vmatprep.subr.mxu0 0.0
  %275 = vmatpush1.msra.mxu0 0.0
  %276 = vmatprep.subr.mxu0 0.0
  %277 = vmatpush1.msra.mxu0 0.0
  %278 = vmatprep.subr.mxu0 0.0
  %279 = vmatpush1.msra.mxu0 0.0
  %280 = vmatprep.subr.mxu0 0.0
  %281 = vmatpush1.msra.mxu0 0.0
  %282 = vmatprep.mubr.f32.mxu0 0.0
  %283 = vmatmul.mubr.f32.gmra.mrb[0].mxu0 %v69
  %v284 = vpop.f32.mrb[0].mxu0
  %v285 = vadd.f32 %v58, %v284
  %v286 = vpop.f32.mrb[0].mxu0
  %v287 = vadd.f32 %v62, %v286
  %288 = vmatprep.mubr.f32.mxu0 0.0
  %289 = vmatmul.mubr.f32.gmra.mrb[0].mxu0 %v72
  %v290 = vpop.f32.mrb[0].mxu0
  %v291 = vadd.f32 %v58, %v290
  %v292 = vpop.f32.mrb[0].mxu0
  %v293 = vadd.f32 %v62, %v292
  %294 = vmatprep.mubr.f32.mxu0 0.0
  %295 = vmatmul.mubr.f32.gmra.mrb[0].mxu0 %v75
  %v296 = vpop.f32.mrb[0].mxu0
  %v297 = vadd.f32 %v58, %v296
  %v298 = vpop.f32.mrb[0].mxu0
  %v299 = vadd.f32 %v62, %v298
  %300 = vmatprep.mubr.f32.mxu0 0.0
  %301 = vmatmul.mubr.f32.gmra.mrb[0].mxu0 %v78
  %v302 = vpop.f32.mrb[0].mxu0
  %v303 = vadd.f32 %v58, %v302
  %v304 = vpop.f32.mrb[0].mxu0
  %v305 = vadd.f32 %v62, %v304
  %306 = vmatprep.mubr.f32.mxu0 0.0
  %307 = vmatmul.mubr.f32.gmra.mrb[0].mxu0 %v81
  %v308 = vpop.f32.mrb[0].mxu0
  %v309 = vadd.f32 %v58, %v308
  %v310 = vpop.f32.mrb[0].mxu0
  %v311 = vadd.f32 %v62, %v310
  %312 = vmatprep.mubr.f32.mxu0 0.0
  %313 = vmatmul.mubr.f32.gmra.mrb[0].mxu0 %v84
  %v314 = vpop.f32.mrb[0].mxu0
  %v315 = vadd.f32 %v58, %v314
  %v316 = vpop.f32.mrb[0].mxu0
  %v317 = vadd.f32 %v62, %v316
  %318 = vmatprep.mubr.f32.mxu0 0.0
  %319 = vmatmul.mubr.f32.gmra.mrb[0].mxu0 %v87
  %v320 = vpop.f32.mrb[0].mxu0
  %v321 = vadd.f32 %v58, %v320
  %v322 = vpop.f32.mrb[0].mxu0
  %v323 = vadd.f32 %v62, %v322
  %324 = vmatprep.mubr.f32.mxu0 0.0
  %325 = vmatmul.mubr.f32.gmra.mrb[0].mxu0 %v90
  %v326 = vpop.f32.mrb[0].mxu0
  %v327 = vadd.f32 %v58, %v326
  %v328 = vpop.f32.mrb[0].mxu0
  %v329 = vadd.f32 %v62, %v328
  %330 = vdwg.mxu0
  %331 = vst [vmem:[#allocation2] sm:$0xff] %v172
  %332 = vst [vmem:[#allocation2 + $0x8] sm:$0xff] %v174
  %333 = vst [vmem:[#allocation2 + $0x10] sm:$0xff] %v285
  %334 = vst [vmem:[#allocation2 + $0x18] sm:$0xff] %v287
  %335 = vst [vmem:[#allocation2 + $0x20] sm:$0xff] %v178
  %336 = vst [vmem:[#allocation2 + $0x28] sm:$0xff] %v180
  %337 = vst [vmem:[#allocation2 + $0x30] sm:$0xff] %v291
  %338 = vst [vmem:[#allocation2 + $0x38] sm:$0xff] %v293
  %339 = vst [vmem:[#allocation2 + $0x40] sm:$0xff] %v184
  %340 = vst [vmem:[#allocation2 + $0x48] sm:$0xff] %v186
  %341 = vst [vmem:[#allocation2 + $0x50] sm:$0xff] %v297
  %342 = vst [vmem:[#allocation2 + $0x58] sm:$0xff] %v299
  %343 = vst [vmem:[#allocation2 + $0x60] sm:$0xff] %v190
  %344 = vst [vmem:[#allocation2 + $0x68] sm:$0xff] %v192
  %345 = vst [vmem:[#allocation2 + $0x70] sm:$0xff] %v303
  %346 = vst [vmem:[#allocation2 + $0x78] sm:$0xff] %v305
  %347 = vst [vmem:[#allocation2 + $0x80] sm:$0xff] %v196
  %348 = vst [vmem:[#allocation2 + $0x88] sm:$0xff] %v198
  %349 = vst [vmem:[#allocation2 + $0x90] sm:$0xff] %v309
  %350 = vst [vmem:[#allocation2 + $0x98] sm:$0xff] %v311
  %351 = vst [vmem:[#allocation2 + $0xa0] sm:$0xff] %v202
  %352 = vst [vmem:[#allocation2 + $0xa8] sm:$0xff] %v204
  %353 = vst [vmem:[#allocation2 + $0xb0] sm:$0xff] %v315
  %354 = vst [vmem:[#allocation2 + $0xb8] sm:$0xff] %v317
  %355 = vst [vmem:[#allocation2 + $0xc0] sm:$0xff] %v208
  %356 = vst [vmem:[#allocation2 + $0xc8] sm:$0xff] %v210
  %357 = vst [vmem:[#allocation2 + $0xd0] sm:$0xff] %v321
  %358 = vst [vmem:[#allocation2 + $0xd8] sm:$0xff] %v323
  %359 = vst [vmem:[#allocation2 + $0xe0] sm:$0xff] %v214
  %360 = vst [vmem:[#allocation2 + $0xe8] sm:$0xff] %v216
  %361 = vst [vmem:[#allocation2 + $0xf0] sm:$0xff] %v327
  %362 = vst [vmem:[#allocation2 + $0xf8] sm:$0xff] %v329
  %v363 = vld [vmem:[%s2] sm:$0xff]
  %v364 = vld [vmem:[%s2 + $0x8] sm:$0xff]
  %v365 = vld [vmem:[%s2 + $0x10] sm:$0xff]
  %v366 = vld [vmem:[%s2 + $0x18] sm:$0xff]
  %v367 = vld [vmem:[%s2 + $0x20] sm:$0xff]
  %v368 = vld [vmem:[%s2 + $0x28] sm:$0xff]
  %v369 = vld [vmem:[%s2 + $0x30] sm:$0xff]
  %v370 = vld [vmem:[%s2 + $0x38] sm:$0xff]
  %v371 = vld [vmem:[%s2 + $0x40] sm:$0xff]
  %v372 = vld [vmem:[%s2 + $0x48] sm:$0xff]
  %v373 = vld [vmem:[%s2 + $0x50] sm:$0xff]
  %v374 = vld [vmem:[%s2 + $0x58] sm:$0xff]
  %v375 = vld [vmem:[%s2 + $0x60] sm:$0xff]
  %v376 = vld [vmem:[%s2 + $0x68] sm:$0xff]
  %v377 = vld [vmem:[%s2 + $0x70] sm:$0xff]
  %v378 = vld [vmem:[%s2 + $0x78] sm:$0xff]
  %v379 = vld [vmem:[%s2 + $0x80] sm:$0xff]
  %v380 = vld [vmem:[%s2 + $0x88] sm:$0xff]
  %v381 = vld [vmem:[%s2 + $0x90] sm:$0xff]
  %v382 = vld [vmem:[%s2 + $0x98] sm:$0xff]
  %v383 = vld [vmem:[%s2 + $0xa0] sm:$0xff]
  %v384 = vld [vmem:[%s2 + $0xa8] sm:$0xff]
  %v385 = vld [vmem:[%s2 + $0xb0] sm:$0xff]
  %v386 = vld [vmem:[%s2 + $0xb8] sm:$0xff]
  %v387 = vld [vmem:[%s2 + $0xc0] sm:$0xff]
  %v388 = vld [vmem:[%s2 + $0xc8] sm:$0xff]
  %v389 = vld [vmem:[%s2 + $0xd0] sm:$0xff]
  %v390 = vld [vmem:[%s2 + $0xd8] sm:$0xff]
  %v391 = vld [vmem:[%s2 + $0xe0] sm:$0xff]
  %v392 = vld [vmem:[%s2 + $0xe8] sm:$0xff]
  %v393 = vld [vmem:[%s2 + $0xf0] sm:$0xff]
  %v394 = vld [vmem:[%s2 + $0xf8] sm:$0xff]
  %v395 = vld [vmem:[%s2 + $0x100] sm:$0xff]
  %v396 = vld [vmem:[%s2 + $0x108] sm:$0xff]
  %v397 = vld [vmem:[%s2 + $0x110] sm:$0xff]
  %v398 = vld [vmem:[%s2 + $0x118] sm:$0xff]
  %v399 = vld [vmem:[%s2 + $0x120] sm:$0xff]
  %v400 = vld [vmem:[%s2 + $0x128] sm:$0xff]
  %v401 = vld [vmem:[%s2 + $0x130] sm:$0xff]
  %v402 = vld [vmem:[%s2 + $0x138] sm:$0xff]
  %v403 = vld [vmem:[%s2 + $0x140] sm:$0xff]
  %v404 = vld [vmem:[%s2 + $0x148] sm:$0xff]
  %v405 = vld [vmem:[%s2 + $0x150] sm:$0xff]
  %v406 = vld [vmem:[%s2 + $0x158] sm:$0xff]
  %v407 = vld [vmem:[%s2 + $0x160] sm:$0xff]
  %v408 = vld [vmem:[%s2 + $0x168] sm:$0xff]
  %v409 = vld [vmem:[%s2 + $0x170] sm:$0xff]
  %v410 = vld [vmem:[%s2 + $0x178] sm:$0xff]
  %v411 = vld [vmem:[%s2 + $0x180] sm:$0xff]
  %v412 = vld [vmem:[%s2 + $0x188] sm:$0xff]
  %v413 = vld [vmem:[%s2 + $0x190] sm:$0xff]
  %v414 = vld [vmem:[%s2 + $0x198] sm:$0xff]
  %v415 = vld [vmem:[%s2 + $0x1a0] sm:$0xff]
  %v416 = vld [vmem:[%s2 + $0x1a8] sm:$0xff]
  %v417 = vld [vmem:[%s2 + $0x1b0] sm:$0xff]
  %v418 = vld [vmem:[%s2 + $0x1b8] sm:$0xff]
  %v419 = vld [vmem:[%s2 + $0x1c0] sm:$0xff]
  %v420 = vld [vmem:[%s2 + $0x1c8] sm:$0xff]
  %v421 = vld [vmem:[%s2 + $0x1d0] sm:$0xff]
  %v422 = vld [vmem:[%s2 + $0x1d8] sm:$0xff]
  %v423 = vld [vmem:[%s2 + $0x1e0] sm:$0xff]
  %v424 = vld [vmem:[%s2 + $0x1e8] sm:$0xff]
  %v425 = vld [vmem:[%s2 + $0x1f0] sm:$0xff]
  %v426 = vld [vmem:[%s2 + $0x1f8] sm:$0xff]
  %v427 = vld [vmem:[%s6] sm:$0xff]
  %v428 = vld [vmem:[%s7] sm:$0xff]
  %v429 = vld [vmem:[#allocation2] sm:$0xff]
  %v430 = vld [vmem:[#allocation2 + $0x8] sm:$0xff]
  %v431 = vld [vmem:[#allocation2 + $0x10] sm:$0xff]
  %v432 = vld [vmem:[#allocation2 + $0x18] sm:$0xff]
  %433 = vmatprep.subr.mxu0 %v364
  %434 = vmatpush1.msra.mxu0 %v363
  %435 = vmatprep.subr.mxu0 %v368
  %436 = vmatpush1.msra.mxu0 %v367
  %437 = vmatprep.subr.mxu0 %v372
  %438 = vmatpush1.msra.mxu0 %v371
  %439 = vmatprep.subr.mxu0 %v376
  %440 = vmatpush1.msra.mxu0 %v375
  %441 = vmatprep.subr.mxu0 %v380
  %442 = vmatpush1.msra.mxu0 %v379
  %443 = vmatprep.subr.mxu0 %v384
  %444 = vmatpush1.msra.mxu0 %v383
  %445 = vmatprep.subr.mxu0 %v388
  %446 = vmatpush1.msra.mxu0 %v387
  %447 = vmatprep.subr.mxu0 %v392
  %448 = vmatpush1.msra.mxu0 %v391
  %449 = vmatprep.subr.mxu0 %v396
  %450 = vmatpush1.msra.mxu0 %v395
  %451 = vmatprep.subr.mxu0 %v400
  %452 = vmatpush1.msra.mxu0 %v399
  %453 = vmatprep.subr.mxu0 %v404
  %454 = vmatpush1.msra.mxu0 %v403
  %455 = vmatprep.subr.mxu0 %v408
  %456 = vmatpush1.msra.mxu0 %v407
  %457 = vmatprep.subr.mxu0 %v412
  %458 = vmatpush1.msra.mxu0 %v411
  %459 = vmatprep.subr.mxu0 %v416
  %460 = vmatpush1.msra.mxu0 %v415
  %461 = vmatprep.subr.mxu0 %v420
  %462 = vmatpush1.msra.mxu0 %v419
  %463 = vmatprep.subr.mxu0 %v424
  %464 = vmatpush1.msra.mxu0 %v423
  %465 = vmatprep.subr.mxu0 0.0
  %466 = vmatpush1.msra.mxu0 0.0
  %467 = vmatprep.subr.mxu0 0.0
  %468 = vmatpush1.msra.mxu0 0.0
  %469 = vmatprep.subr.mxu0 0.0
  %470 = vmatpush1.msra.mxu0 0.0
  %471 = vmatprep.subr.mxu0 0.0
  %472 = vmatpush1.msra.mxu0 0.0
  %473 = vmatprep.subr.mxu0 0.0
  %474 = vmatpush1.msra.mxu0 0.0
  %475 = vmatprep.subr.mxu0 0.0
  %476 = vmatpush1.msra.mxu0 0.0
  %477 = vmatprep.subr.mxu0 0.0
  %478 = vmatpush1.msra.mxu0 0.0
  %479 = vmatprep.subr.mxu0 0.0
  %480 = vmatpush1.msra.mxu0 0.0
  %481 = vmatprep.subr.mxu0 0.0
  %482 = vmatpush1.msra.mxu0 0.0
  %483 = vmatprep.subr.mxu0 0.0
  %484 = vmatpush1.msra.mxu0 0.0
  %485 = vmatprep.subr.mxu0 0.0
  %486 = vmatpush1.msra.mxu0 0.0
  %487 = vmatprep.subr.mxu0 0.0
  %488 = vmatpush1.msra.mxu0 0.0
  %489 = vmatprep.subr.mxu0 0.0
  %490 = vmatpush1.msra.mxu0 0.0
  %491 = vmatprep.subr.mxu0 0.0
  %492 = vmatpush1.msra.mxu0 0.0
  %493 = vmatprep.subr.mxu0 0.0
  %494 = vmatpush1.msra.mxu0 0.0
  %495 = vmatprep.subr.mxu0 0.0
  %496 = vmatpush1.msra.mxu0 0.0
  %497 = vmatprep.mubr.f32.mxu0 0.0
  %498 = vmatmul.mubr.f32.gmra.mrb[0].mxu0 %v427
  %v499 = vpop.f32.mrb[0].mxu0
  %v500 = vadd.f32 0.0, %v499
  %v501 = vpop.f32.mrb[0].mxu0
  %v502 = vadd.f32 0.0, %v501
  %503 = vdwg.mxu0
  %504 = vmatprep.subr.mxu0 %v366
  %505 = vmatpush1.msra.mxu0 %v365
  %506 = vmatprep.subr.mxu0 %v370
  %507 = vmatpush1.msra.mxu0 %v369
  %508 = vmatprep.subr.mxu0 %v374
  %509 = vmatpush1.msra.mxu0 %v373
  %510 = vmatprep.subr.mxu0 %v378
  %511 = vmatpush1.msra.mxu0 %v377
  %512 = vmatprep.subr.mxu0 %v382
  %513 = vmatpush1.msra.mxu0 %v381
  %514 = vmatprep.subr.mxu0 %v386
  %515 = vmatpush1.msra.mxu0 %v385
  %516 = vmatprep.subr.mxu0 %v390
  %517 = vmatpush1.msra.mxu0 %v389
  %518 = vmatprep.subr.mxu0 %v394
  %519 = vmatpush1.msra.mxu0 %v393
  %520 = vmatprep.subr.mxu0 %v398
  %521 = vmatpush1.msra.mxu0 %v397
  %522 = vmatprep.subr.mxu0 %v402
  %523 = vmatpush1.msra.mxu0 %v401
  %524 = vmatprep.subr.mxu0 %v406
  %525 = vmatpush1.msra.mxu0 %v405
  %526 = vmatprep.subr.mxu0 %v410
  %527 = vmatpush1.msra.mxu0 %v409
  %528 = vmatprep.subr.mxu0 %v414
  %529 = vmatpush1.msra.mxu0 %v413
  %530 = vmatprep.subr.mxu0 %v418
  %531 = vmatpush1.msra.mxu0 %v417
  %532 = vmatprep.subr.mxu0 %v422
  %533 = vmatpush1.msra.mxu0 %v421
  %534 = vmatprep.subr.mxu0 %v426
  %535 = vmatpush1.msra.mxu0 %v425
  %536 = vmatprep.subr.mxu0 0.0
  %537 = vmatpush1.msra.mxu0 0.0
  %538 = vmatprep.subr.mxu0 0.0
  %539 = vmatpush1.msra.mxu0 0.0
  %540 = vmatprep.subr.mxu0 0.0
  %541 = vmatpush1.msra.mxu0 0.0
  %542 = vmatprep.subr.mxu0 0.0
  %543 = vmatpush1.msra.mxu0 0.0
  %544 = vmatprep.subr.mxu0 0.0
  %545 = vmatpush1.msra.mxu0 0.0
  %546 = vmatprep.subr.mxu0 0.0
  %547 = vmatpush1.msra.mxu0 0.0
  %548 = vmatprep.subr.mxu0 0.0
  %549 = vmatpush1.msra.mxu0 0.0
  %550 = vmatprep.subr.mxu0 0.0
  %551 = vmatpush1.msra.mxu0 0.0
  %552 = vmatprep.subr.mxu0 0.0
  %553 = vmatpush1.msra.mxu0 0.0
  %554 = vmatprep.subr.mxu0 0.0
  %555 = vmatpush1.msra.mxu0 0.0
  %556 = vmatprep.subr.mxu0 0.0
  %557 = vmatpush1.msra.mxu0 0.0
  %558 = vmatprep.subr.mxu0 0.0
  %559 = vmatpush1.msra.mxu0 0.0
  %560 = vmatprep.subr.mxu0 0.0
  %561 = vmatpush1.msra.mxu0 0.0
  %562 = vmatprep.subr.mxu0 0.0
  %563 = vmatpush1.msra.mxu0 0.0
  %564 = vmatprep.subr.mxu0 0.0
  %565 = vmatpush1.msra.mxu0 0.0
  %566 = vmatprep.subr.mxu0 0.0
  %567 = vmatpush1.msra.mxu0 0.0
  %568 = vmatprep.mubr.f32.mxu0 0.0
  %569 = vmatmul.mubr.f32.gmra.mrb[0].mxu0 %v427
  %v570 = vpop.f32.mrb[0].mxu0
  %v571 = vadd.f32 0.0, %v570
  %v572 = vpop.f32.mrb[0].mxu0
  %v573 = vadd.f32 0.0, %v572
  %574 = vdwg.mxu0
  %v575 = vadd.f32 %v429, %v500
  %v576 = vadd.f32 %v430, %v502
  %v577 = vadd.f32 %v431, %v571
  %v578 = vadd.f32 %v432, %v573
  %v579 = vmul.f32 %v575, 0.5
  %v580 = vmul.f32 %v576, 0.5
  %v581 = vmul.f32 %v577, 0.5
  %v582 = vtanh.pop %v579
  %v583 = vtanh.pop %v580
  %v584 = vtanh.pop %v581
  %v585 = vmul.f32 %v582, 0.5
  %v586 = vmul.f32 %v583, 0.5
  %v587 = vmul.f32 %v584, 0.5
  %v588 = vadd.f32 %v585, 0.5
  %v589 = vadd.f32 %v586, 0.5
  %v590 = vadd.f32 %v587, 0.5
  %v591 = vtanh.pop %v578
  %v592 = vmul.f32 %v589, %v428
  %v593 = vmul.f32 %v588, %v591
  %v594 = vadd.f32 %v592, %v593
  %v595 = vtanh.pop %v594
  %v596 = vmul.f32 %v590, %v595
  %597 = vst [vmem:[#allocation3] sm:$0xff] %v596
  %v598 = vld [vmem:[#allocation2 + $0x20] sm:$0xff]
  %v599 = vld [vmem:[#allocation2 + $0x28] sm:$0xff]
  %v600 = vld [vmem:[#allocation2 + $0x30] sm:$0xff]
  %v601 = vld [vmem:[#allocation2 + $0x38] sm:$0xff]
  %602 = vmatprep.subr.mxu0 %v364
  %603 = vmatpush1.msra.mxu0 %v363
  %604 = vmatprep.subr.mxu0 %v368
  %605 = vmatpush1.msra.mxu0 %v367
  %606 = vmatprep.subr.mxu0 %v372
  %607 = vmatpush1.msra.mxu0 %v371
  %608 = vmatprep.subr.mxu0 %v376
  %609 = vmatpush1.msra.mxu0 %v375
  %610 = vmatprep.subr.mxu0 %v380
  %611 = vmatpush1.msra.mxu0 %v379
  %612 = vmatprep.subr.mxu0 %v384
  %613 = vmatpush1.msra.mxu0 %v383
  %614 = vmatprep.subr.mxu0 %v388
  %615 = vmatpush1.msra.mxu0 %v387
  %616 = vmatprep.subr.mxu0 %v392
  %617 = vmatpush1.msra.mxu0 %v391
  %618 = vmatprep.subr.mxu0 %v396
  %619 = vmatpush1.msra.mxu0 %v395
  %620 = vmatprep.subr.mxu0 %v400
  %621 = vmatpush1.msra.mxu0 %v399
  %622 = vmatprep.subr.mxu0 %v404
  %623 = vmatpush1.msra.mxu0 %v403
  %624 = vmatprep.subr.mxu0 %v408
  %625 = vmatpush1.msra.mxu0 %v407
  %626 = vmatprep.subr.mxu0 %v412
  %627 = vmatpush1.msra.mxu0 %v411
  %628 = vmatprep.subr.mxu0 %v416
  %629 = vmatpush1.msra.mxu0 %v415
  %630 = vmatprep.subr.mxu0 %v420
  %631 = vmatpush1.msra.mxu0 %v419
  %632 = vmatprep.subr.mxu0 %v424
  %633 = vmatpush1.msra.mxu0 %v423
  %634 = vmatprep.subr.mxu0 0.0
  %635 = vmatpush1.msra.mxu0 0.0
  %636 = vmatprep.subr.mxu0 0.0
  %637 = vmatpush1.msra.mxu0 0.0
  %638 = vmatprep.subr.mxu0 0.0
  %639 = vmatpush1.msra.mxu0 0.0
  %640 = vmatprep.subr.mxu0 0.0
  %641 = vmatpush1.msra.mxu0 0.0
  %642 = vmatprep.subr.mxu0 0.0
  %643 = vmatpush1.msra.mxu0 0.0
  %644 = vmatprep.subr.mxu0 0.0
  %645 = vmatpush1.msra.mxu0 0.0
  %646 = vmatprep.subr.mxu0 0.0
  %647 = vmatpush1.msra.mxu0 0.0
  %648 = vmatprep.subr.mxu0 0.0
  %649 = vmatpush1.msra.mxu0 0.0
  %650 = vmatprep.subr.mxu0 0.0
  %651 = vmatpush1.msra.mxu0 0.0
  %652 = vmatprep.subr.mxu0 0.0
  %653 = vmatpush1.msra.mxu0 0.0
  %654 = vmatprep.subr.mxu0 0.0
  %655 = vmatpush1.msra.mxu0 0.0
  %656 = vmatprep.subr.mxu0 0.0
  %657 = vmatpush1.msra.mxu0 0.0
  %658 = vmatprep.subr.mxu0 0.0
  %659 = vmatpush1.msra.mxu0 0.0
  %660 = vmatprep.subr.mxu0 0.0
  %661 = vmatpush1.msra.mxu0 0.0
  %662 = vmatprep.subr.mxu0 0.0
  %663 = vmatpush1.msra.mxu0 0.0
  %664 = vmatprep.subr.mxu0 0.0
  %665 = vmatpush1.msra.mxu0 0.0
  %666 = vmatprep.mubr.f32.mxu0 0.0
  %667 = vmatmul.mubr.f32.gmra.mrb[0].mxu0 %v596
  %v668 = vpop.f32.mrb[0].mxu0
  %v669 = vadd.f32 0.0, %v668
  %v670 = vpop.f32.mrb[0].mxu0
  %v671 = vadd.f32 0.0, %v670
  %672 = vdwg.mxu0
  %673 = vmatprep.subr.mxu0 %v366
  %674 = vmatpush1.msra.mxu0 %v365
  %675 = vmatprep.subr.mxu0 %v370
  %676 = vmatpush1.msra.mxu0 %v369
  %677 = vmatprep.subr.mxu0 %v374
  %678 = vmatpush1.msra.mxu0 %v373
  %679 = vmatprep.subr.mxu0 %v378
  %680 = vmatpush1.msra.mxu0 %v377
  %681 = vmatprep.subr.mxu0 %v382
  %682 = vmatpush1.msra.mxu0 %v381
  %683 = vmatprep.subr.mxu0 %v386
  %684 = vmatpush1.msra.mxu0 %v385
  %685 = vmatprep.subr.mxu0 %v390
  %686 = vmatpush1.msra.mxu0 %v389
  %687 = vmatprep.subr.mxu0 %v394
  %688 = vmatpush1.msra.mxu0 %v393
  %689 = vmatprep.subr.mxu0 %v398
  %690 = vmatpush1.msra.mxu0 %v397
  %691 = vmatprep.subr.mxu0 %v402
  %692 = vmatpush1.msra.mxu0 %v401
  %693 = vmatprep.subr.mxu0 %v406
  %694 = vmatpush1.msra.mxu0 %v405
  %695 = vmatprep.subr.mxu0 %v410
  %696 = vmatpush1.msra.mxu0 %v409
  %697 = vmatprep.subr.mxu0 %v414
  %698 = vmatpush1.msra.mxu0 %v413
  %699 = vmatprep.subr.mxu0 %v418
  %700 = vmatpush1.msra.mxu0 %v417
  %701 = vmatprep.subr.mxu0 %v422
  %702 = vmatpush1.msra.mxu0 %v421
  %703 = vmatprep.subr.mxu0 %v426
  %704 = vmatpush1.msra.mxu0 %v425
  %705 = vmatprep.subr.mxu0 0.0
  %706 = vmatpush1.msra.mxu0 0.0
  %707 = vmatprep.subr.mxu0 0.0
  %708 = vmatpush1.msra.mxu0 0.0
  %709 = vmatprep.subr.mxu0 0.0
  %710 = vmatpush1.msra.mxu0 0.0
  %711 = vmatprep.subr.mxu0 0.0
  %712 = vmatpush1.msra.mxu0 0.0
  %713 = vmatprep.subr.mxu0 0.0
  %714 = vmatpush1.msra.mxu0 0.0
  %715 = vmatprep.subr.mxu0 0.0
  %716 = vmatpush1.msra.mxu0 0.0
  %717 = vmatprep.subr.mxu0 0.0
  %718 = vmatpush1.msra.mxu0 0.0
  %719 = vmatprep.subr.mxu0 0.0
  %720 = vmatpush1.msra.mxu0 0.0
  %721 = vmatprep.subr.mxu0 0.0
  %722 = vmatpush1.msra.mxu0 0.0
  %723 = vmatprep.subr.mxu0 0.0
  %724 = vmatpush1.msra.mxu0 0.0
  %725 = vmatprep.subr.mxu0 0.0
  %726 = vmatpush1.msra.mxu0 0.0
  %727 = vmatprep.subr.mxu0 0.0
  %728 = vmatpush1.msra.mxu0 0.0
  %729 = vmatprep.subr.mxu0 0.0
  %730 = vmatpush1.msra.mxu0 0.0
  %731 = vmatprep.subr.mxu0 0.0
  %732 = vmatpush1.msra.mxu0 0.0
  %733 = vmatprep.subr.mxu0 0.0
  %734 = vmatpush1.msra.mxu0 0.0
  %735 = vmatprep.subr.mxu0 0.0
  %736 = vmatpush1.msra.mxu0 0.0
  %737 = vmatprep.mubr.f32.mxu0 0.0
  %738 = vmatmul.mubr.f32.gmra.mrb[0].mxu0 %v596
  %v739 = vpop.f32.mrb[0].mxu0
  %v740 = vadd.f32 0.0, %v739
  %v741 = vpop.f32.mrb[0].mxu0
  %v742 = vadd.f32 0.0, %v741
  %743 = vdwg.mxu0
  %v744 = vadd.f32 %v598, %v669
  %v745 = vadd.f32 %v599, %v671
  %v746 = vadd.f32 %v600, %v740
  %v747 = vadd.f32 %v601, %v742
  %v748 = vmul.f32 %v744, 0.5
  %v749 = vmul.f32 %v745, 0.5
  %v750 = vmul.f32 %v746, 0.5
  %v751 = vtanh.pop %v748
  %v752 = vtanh.pop %v749
  %v753 = vtanh.pop %v750
  %v754 = vmul.f32 %v751, 0.5
  %v755 = vmul.f32 %v752, 0.5
  %v756 = vmul.f32 %v753, 0.5
  %v757 = vadd.f32 %v754, 0.5
  %v758 = vadd.f32 %v755, 0.5
  %v759 = vadd.f32 %v756, 0.5
  %v760 = vtanh.pop %v747
  %v761 = vmul.f32 %v758, %v594
  %v762 = vmul.f32 %v757, %v760
  %v763 = vadd.f32 %v761, %v762
  %v764 = vtanh.pop %v763
  %v765 = vmul.f32 %v759, %v764
  %766 = vst [vmem:[#allocation3 + $0x8] sm:$0xff] %v765
  %v767 = vld [vmem:[#allocation2 + $0x40] sm:$0xff]
  %v768 = vld [vmem:[#allocation2 + $0x48] sm:$0xff]
  %v769 = vld [vmem:[#allocation2 + $0x50] sm:$0xff]
  %v770 = vld [vmem:[#allocation2 + $0x58] sm:$0xff]
  %771 = vmatprep.subr.mxu0 %v364
  %772 = vmatpush1.msra.mxu0 %v363
  %773 = vmatprep.subr.mxu0 %v368
  %774 = vmatpush1.msra.mxu0 %v367
  %775 = vmatprep.subr.mxu0 %v372
  %776 = vmatpush1.msra.mxu0 %v371
  %777 = vmatprep.subr.mxu0 %v376
  %778 = vmatpush1.msra.mxu0 %v375
  %779 = vmatprep.subr.mxu0 %v380
  %780 = vmatpush1.msra.mxu0 %v379
  %781 = vmatprep.subr.mxu0 %v384
  %782 = vmatpush1.msra.mxu0 %v383
  %783 = vmatprep.subr.mxu0 %v388
  %784 = vmatpush1.msra.mxu0 %v387
  %785 = vmatprep.subr.mxu0 %v392
  %786 = vmatpush1.msra.mxu0 %v391
  %787 = vmatprep.subr.mxu0 %v396
  %788 = vmatpush1.msra.mxu0 %v395
  %789 = vmatprep.subr.mxu0 %v400
  %790 = vmatpush1.msra.mxu0 %v399
  %791 = vmatprep.subr.mxu0 %v404
  %792 = vmatpush1.msra.mxu0 %v403
  %793 = vmatprep.subr.mxu0 %v408
  %794 = vmatpush1.msra.mxu0 %v407
  %795 = vmatprep.subr.mxu0 %v412
  %796 = vmatpush1.msra.mxu0 %v411
  %797 = vmatprep.subr.mxu0 %v416
  %798 = vmatpush1.msra.mxu0 %v415
  %799 = vmatprep.subr.mxu0 %v420
  %800 = vmatpush1.msra.mxu0 %v419
  %801 = vmatprep.subr.mxu0 %v424
  %802 = vmatpush1.msra.mxu0 %v423
  %803 = vmatprep.subr.mxu0 0.0
  %804 = vmatpush1.msra.mxu0 0.0
  %805 = vmatprep.subr.mxu0 0.0
  %806 = vmatpush1.msra.mxu0 0.0
  %807 = vmatprep.subr.mxu0 0.0
  %808 = vmatpush1.msra.mxu0 0.0
  %809 = vmatprep.subr.mxu0 0.0
  %810 = vmatpush1.msra.mxu0 0.0
  %811 = vmatprep.subr.mxu0 0.0
  %812 = vmatpush1.msra.mxu0 0.0
  %813 = vmatprep.subr.mxu0 0.0
  %814 = vmatpush1.msra.mxu0 0.0
  %815 = vmatprep.subr.mxu0 0.0
  %816 = vmatpush1.msra.mxu0 0.0
  %817 = vmatprep.subr.mxu0 0.0
  %818 = vmatpush1.msra.mxu0 0.0
  %819 = vmatprep.subr.mxu0 0.0
  %820 = vmatpush1.msra.mxu0 0.0
  %821 = vmatprep.subr.mxu0 0.0
  %822 = vmatpush1.msra.mxu0 0.0
  %823 = vmatprep.subr.mxu0 0.0
  %824 = vmatpush1.msra.mxu0 0.0
  %825 = vmatprep.subr.mxu0 0.0
  %826 = vmatpush1.msra.mxu0 0.0
  %827 = vmatprep.subr.mxu0 0.0
  %828 = vmatpush1.msra.mxu0 0.0
  %829 = vmatprep.subr.mxu0 0.0
  %830 = vmatpush1.msra.mxu0 0.0
  %831 = vmatprep.subr.mxu0 0.0
  %832 = vmatpush1.msra.mxu0 0.0
  %833 = vmatprep.subr.mxu0 0.0
  %834 = vmatpush1.msra.mxu0 0.0
  %835 = vmatprep.mubr.f32.mxu0 0.0
  %836 = vmatmul.mubr.f32.gmra.mrb[0].mxu0 %v765
  %v837 = vpop.f32.mrb[0].mxu0
  %v838 = vadd.f32 0.0, %v837
  %v839 = vpop.f32.mrb[0].mxu0
  %v840 = vadd.f32 0.0, %v839
  %841 = vdwg.mxu0
  %842 = vmatprep.subr.mxu0 %v366
  %843 = vmatpush1.msra.mxu0 %v365
  %844 = vmatprep.subr.mxu0 %v370
  %845 = vmatpush1.msra.mxu0 %v369
  %846 = vmatprep.subr.mxu0 %v374
  %847 = vmatpush1.msra.mxu0 %v373
  %848 = vmatprep.subr.mxu0 %v378
  %849 = vmatpush1.msra.mxu0 %v377
  %850 = vmatprep.subr.mxu0 %v382
  %851 = vmatpush1.msra.mxu0 %v381
  %852 = vmatprep.subr.mxu0 %v386
  %853 = vmatpush1.msra.mxu0 %v385
  %854 = vmatprep.subr.mxu0 %v390
  %855 = vmatpush1.msra.mxu0 %v389
  %856 = vmatprep.subr.mxu0 %v394
  %857 = vmatpush1.msra.mxu0 %v393
  %858 = vmatprep.subr.mxu0 %v398
  %859 = vmatpush1.msra.mxu0 %v397
  %860 = vmatprep.subr.mxu0 %v402
  %861 = vmatpush1.msra.mxu0 %v401
  %862 = vmatprep.subr.mxu0 %v406
  %863 = vmatpush1.msra.mxu0 %v405
  %864 = vmatprep.subr.mxu0 %v410
  %865 = vmatpush1.msra.mxu0 %v409
  %866 = vmatprep.subr.mxu0 %v414
  %867 = vmatpush1.msra.mxu0 %v413
  %868 = vmatprep.subr.mxu0 %v418
  %869 = vmatpush1.msra.mxu0 %v417
  %870 = vmatprep.subr.mxu0 %v422
  %871 = vmatpush1.msra.mxu0 %v421
  %872 = vmatprep.subr.mxu0 %v426
  %873 = vmatpush1.msra.mxu0 %v425
  %874 = vmatprep.subr.mxu0 0.0
  %875 = vmatpush1.msra.mxu0 0.0
  %876 = vmatprep.subr.mxu0 0.0
  %877 = vmatpush1.msra.mxu0 0.0
  %878 = vmatprep.subr.mxu0 0.0
  %879 = vmatpush1.msra.mxu0 0.0
  %880 = vmatprep.subr.mxu0 0.0
  %881 = vmatpush1.msra.mxu0 0.0
  %882 = vmatprep.subr.mxu0 0.0
  %883 = vmatpush1.msra.mxu0 0.0
  %884 = vmatprep.subr.mxu0 0.0
  %885 = vmatpush1.msra.mxu0 0.0
  %886 = vmatprep.subr.mxu0 0.0
  %887 = vmatpush1.msra.mxu0 0.0
  %888 = vmatprep.subr.mxu0 0.0
  %889 = vmatpush1.msra.mxu0 0.0
  %890 = vmatprep.subr.mxu0 0.0
  %891 = vmatpush1.msra.mxu0 0.0
  %892 = vmatprep.subr.mxu0 0.0
  %893 = vmatpush1.msra.mxu0 0.0
  %894 = vmatprep.subr.mxu0 0.0
  %895 = vmatpush1.msra.mxu0 0.0
  %896 = vmatprep.subr.mxu0 0.0
  %897 = vmatpush1.msra.mxu0 0.0
  %898 = vmatprep.subr.mxu0 0.0
  %899 = vmatpush1.msra.mxu0 0.0
  %900 = vmatprep.subr.mxu0 0.0
  %901 = vmatpush1.msra.mxu0 0.0
  %902 = vmatprep.subr.mxu0 0.0
  %903 = vmatpush1.msra.mxu0 0.0
  %904 = vmatprep.subr.mxu0 0.0
  %905 = vmatpush1.msra.mxu0 0.0
  %906 = vmatprep.mubr.f32.mxu0 0.0
  %907 = vmatmul.mubr.f32.gmra.mrb[0].mxu0 %v765
  %v908 = vpop.f32.mrb[0].mxu0
  %v909 = vadd.f32 0.0, %v908
  %v910 = vpop.f32.mrb[0].mxu0
  %v911 = vadd.f32 0.0, %v910
  %912 = vdwg.mxu0
  %v913 = vadd.f32 %v767, %v838
  %v914 = vadd.f32 %v768, %v840
  %v915 = vadd.f32 %v769, %v909
  %v916 = vadd.f32 %v770, %v911
  %v917 = vmul.f32 %v913, 0.5
  %v918 = vmul.f32 %v914, 0.5
  %v919 = vmul.f32 %v915, 0.5
  %v920 = vtanh.pop %v917
  %v921 = vtanh.pop %v918
  %v922 = vtanh.pop %v919
  %v923 = vmul.f32 %v920, 0.5
  %v924 = vmul.f32 %v921, 0.5
  %v925 = vmul.f32 %v922, 0.5
  %v926 = vadd.f32 %v923, 0.5
  %v927 = vadd.f32 %v924, 0.5
  %v928 = vadd.f32 %v925, 0.5
  %v929 = vtanh.pop %v916
  %v930 = vmul.f32 %v927, %v763
  %v931 = vmul.f32 %v926, %v929
  %v932 = vadd.f32 %v930, %v931
  %v933 = vtanh.pop %v932
  %v934 = vmul.f32 %v928, %v933
  %935 = vst [vmem:[#allocation3 + $0x10] sm:$0xff] %v934
  %v936 = vld [vmem:[#allocation2 + $0x60] sm:$0xff]
  %v937 = vld [vmem:[#allocation2 + $0x68] sm:$0xff]
  %v938 = vld [vmem:[#allocation2 + $0x70] sm:$0xff]
  %v939 = vld [vmem:[#allocation2 + $0x78] sm:$0xff]
  %940 = vmatprep.subr.mxu0 %v364
  %941 = vmatpush1.msra.mxu0 %v363
  %942 = vmatprep.subr.mxu0 %v368
  %943 = vmatpush1.msra.mxu0 %v367
  %944 = vmatprep.subr.mxu0 %v372
  %945 = vmatpush1.msra.mxu0 %v371
  %946 = vmatprep.subr.mxu0 %v376
  %947 = vmatpush1.msra.mxu0 %v375
  %948 = vmatprep.subr.mxu0 %v380
  %949 = vmatpush1.msra.mxu0 %v379
  %950 = vmatprep.subr.mxu0 %v384
  %951 = vmatpush1.msra.mxu0 %v383
  %952 = vmatprep.subr.mxu0 %v388
  %953 = vmatpush1.msra.mxu0 %v387
  %954 = vmatprep.subr.mxu0 %v392
  %955 = vmatpush1.msra.mxu0 %v391
  %956 = vmatprep.subr.mxu0 %v396
  %957 = vmatpush1.msra.mxu0 %v395
  %958 = vmatprep.subr.mxu0 %v400
  %959 = vmatpush1.msra.mxu0 %v399
  %960 = vmatprep.subr.mxu0 %v404
  %961 = vmatpush1.msra.mxu0 %v403
  %962 = vmatprep.subr.mxu0 %v408
  %963 = vmatpush1.msra.mxu0 %v407
  %964 = vmatprep.subr.mxu0 %v412
  %965 = vmatpush1.msra.mxu0 %v411
  %966 = vmatprep.subr.mxu0 %v416
  %967 = vmatpush1.msra.mxu0 %v415
  %968 = vmatprep.subr.mxu0 %v420
  %969 = vmatpush1.msra.mxu0 %v419
  %970 = vmatprep.subr.mxu0 %v424
  %971 = vmatpush1.msra.mxu0 %v423
  %972 = vmatprep.subr.mxu0 0.0
  %973 = vmatpush1.msra.mxu0 0.0
  %974 = vmatprep.subr.mxu0 0.0
  %975 = vmatpush1.msra.mxu0 0.0
  %976 = vmatprep.subr.mxu0 0.0
  %977 = vmatpush1.msra.mxu0 0.0
  %978 = vmatprep.subr.mxu0 0.0
  %979 = vmatpush1.msra.mxu0 0.0
  %980 = vmatprep.subr.mxu0 0.0
  %981 = vmatpush1.msra.mxu0 0.0
  %982 = vmatprep.subr.mxu0 0.0
  %983 = vmatpush1.msra.mxu0 0.0
  %984 = vmatprep.subr.mxu0 0.0
  %985 = vmatpush1.msra.mxu0 0.0
  %986 = vmatprep.subr.mxu0 0.0
  %987 = vmatpush1.msra.mxu0 0.0
  %988 = vmatprep.subr.mxu0 0.0
  %989 = vmatpush1.msra.mxu0 0.0
  %990 = vmatprep.subr.mxu0 0.0
  %991 = vmatpush1.msra.mxu0 0.0
  %992 = vmatprep.subr.mxu0 0.0
  %993 = vmatpush1.msra.mxu0 0.0
  %994 = vmatprep.subr.mxu0 0.0
  %995 = vmatpush1.msra.mxu0 0.0
  %996 = vmatprep.subr.mxu0 0.0
  %997 = vmatpush1.msra.mxu0 0.0
  %998 = vmatprep.subr.mxu0 0.0
  %999 = vmatpush1.msra.mxu0 0.0
  %1000 = vmatprep.subr.mxu0 0.0
  %1001 = vmatpush1.msra.mxu0 0.0
  %1002 = vmatprep.subr.mxu0 0.0
  %1003 = vmatpush1.msra.mxu0 0.0
  %1004 = vmatprep.mubr.f32.mxu0 0.0
  %1005 = vmatmul.mubr.f32.gmra.mrb[0].mxu0 %v934
  %v1006 = vpop.f32.mrb[0].mxu0
  %v1007 = vadd.f32 0.0, %v1006
  %v1008 = vpop.f32.mrb[0].mxu0
  %v1009 = vadd.f32 0.0, %v1008
  %1010 = vdwg.mxu0
  %1011 = vmatprep.subr.mxu0 %v366
  %1012 = vmatpush1.msra.mxu0 %v365
  %1013 = vmatprep.subr.mxu0 %v370
  %1014 = vmatpush1.msra.mxu0 %v369
  %1015 = vmatprep.subr.mxu0 %v374
  %1016 = vmatpush1.msra.mxu0 %v373
  %1017 = vmatprep.subr.mxu0 %v378
  %1018 = vmatpush1.msra.mxu0 %v377
  %1019 = vmatprep.subr.mxu0 %v382
  %1020 = vmatpush1.msra.mxu0 %v381
  %1021 = vmatprep.subr.mxu0 %v386
  %1022 = vmatpush1.msra.mxu0 %v385
  %1023 = vmatprep.subr.mxu0 %v390
  %1024 = vmatpush1.msra.mxu0 %v389
  %1025 = vmatprep.subr.mxu0 %v394
  %1026 = vmatpush1.msra.mxu0 %v393
  %1027 = vmatprep.subr.mxu0 %v398
  %1028 = vmatpush1.msra.mxu0 %v397
  %1029 = vmatprep.subr.mxu0 %v402
  %1030 = vmatpush1.msra.mxu0 %v401
  %1031 = vmatprep.subr.mxu0 %v406
  %1032 = vmatpush1.msra.mxu0 %v405
  %1033 = vmatprep.subr.mxu0 %v410
  %1034 = vmatpush1.msra.mxu0 %v409
  %1035 = vmatprep.subr.mxu0 %v414
  %1036 = vmatpush1.msra.mxu0 %v413
  %1037 = vmatprep.subr.mxu0 %v418
  %1038 = vmatpush1.msra.mxu0 %v417
  %1039 = vmatprep.subr.mxu0 %v422
  %1040 = vmatpush1.msra.mxu0 %v421
  %1041 = vmatprep.subr.mxu0 %v426
  %1042 = vmatpush1.msra.mxu0 %v425
  %1043 = vmatprep.subr.mxu0 0.0
  %1044 = vmatpush1.msra.mxu0 0.0
  %1045 = vmatprep.subr.mxu0 0.0
  %1046 = vmatpush1.msra.mxu0 0.0
  %1047 = vmatprep.subr.mxu0 0.0
  %1048 = vmatpush1.msra.mxu0 0.0
  %1049 = vmatprep.subr.mxu0 0.0
  %1050 = vmatpush1.msra.mxu0 0.0
  %1051 = vmatprep.subr.mxu0 0.0
  %1052 = vmatpush1.msra.mxu0 0.0
  %1053 = vmatprep.subr.mxu0 0.0
  %1054 = vmatpush1.msra.mxu0 0.0
  %1055 = vmatprep.subr.mxu0 0.0
  %1056 = vmatpush1.msra.mxu0 0.0
  %1057 = vmatprep.subr.mxu0 0.0
  %1058 = vmatpush1.msra.mxu0 0.0
  %1059 = vmatprep.subr.mxu0 0.0
  %1060 = vmatpush1.msra.mxu0 0.0
  %1061 = vmatprep.subr.mxu0 0.0
  %1062 = vmatpush1.msra.mxu0 0.0
  %1063 = vmatprep.subr.mxu0 0.0
  %1064 = vmatpush1.msra.mxu0 0.0
  %1065 = vmatprep.subr.mxu0 0.0
  %1066 = vmatpush1.msra.mxu0 0.0
  %1067 = vmatprep.subr.mxu0 0.0
  %1068 = vmatpush1.msra.mxu0 0.0
  %1069 = vmatprep.subr.mxu0 0.0
  %1070 = vmatpush1.msra.mxu0 0.0
  %1071 = vmatprep.subr.mxu0 0.0
  %1072 = vmatpush1.msra.mxu0 0.0
  %1073 = vmatprep.subr.mxu0 0.0
  %1074 = vmatpush1.msra.mxu0 0.0
  %1075 = vmatprep.mubr.f32.mxu0 0.0
  %1076 = vmatmul.mubr.f32.gmra.mrb[0].mxu0 %v934
  %v1077 = vpop.f32.mrb[0].mxu0
  %v1078 = vadd.f32 0.0, %v1077
  %v1079 = vpop.f32.mrb[0].mxu0
  %v1080 = vadd.f32 0.0, %v1079
  %1081 = vdwg.mxu0
  %v1082 = vadd.f32 %v936, %v1007
  %v1083 = vadd.f32 %v937, %v1009
  %v1084 = vadd.f32 %v938, %v1078
  %v1085 = vadd.f32 %v939, %v1080
  %v1086 = vmul.f32 %v1082, 0.5
  %v1087 = vmul.f32 %v1083, 0.5
  %v1088 = vmul.f32 %v1084, 0.5
  %v1089 = vtanh.pop %v1086
  %v1090 = vtanh.pop %v1087
  %v1091 = vtanh.pop %v1088
  %v1092 = vmul.f32 %v1089, 0.5
  %v1093 = vmul.f32 %v1090, 0.5
  %v1094 = vmul.f32 %v1091, 0.5
  %v1095 = vadd.f32 %v1092, 0.5
  %v1096 = vadd.f32 %v1093, 0.5
  %v1097 = vadd.f32 %v1094, 0.5
  %v1098 = vtanh.pop %v1085
  %v1099 = vmul.f32 %v1096, %v932
  %v1100 = vmul.f32 %v1095, %v1098
  %v1101 = vadd.f32 %v1099, %v1100
  %v1102 = vtanh.pop %v1101
  %v1103 = vmul.f32 %v1097, %v1102
  %1104 = vst [vmem:[#allocation3 + $0x18] sm:$0xff] %v1103
  %v1105 = vld [vmem:[#allocation2 + $0x80] sm:$0xff]
  %v1106 = vld [vmem:[#allocation2 + $0x88] sm:$0xff]
  %v1107 = vld [vmem:[#allocation2 + $0x90] sm:$0xff]
  %v1108 = vld [vmem:[#allocation2 + $0x98] sm:$0xff]
  %1109 = vmatprep.subr.mxu0 %v364
  %1110 = vmatpush1.msra.mxu0 %v363
  %1111 = vmatprep.subr.mxu0 %v368
  %1112 = vmatpush1.msra.mxu0 %v367
  %1113 = vmatprep.subr.mxu0 %v372
  %1114 = vmatpush1.msra.mxu0 %v371
  %1115 = vmatprep.subr.mxu0 %v376
  %1116 = vmatpush1.msra.mxu0 %v375
  %1117 = vmatprep.subr.mxu0 %v380
  %1118 = vmatpush1.msra.mxu0 %v379
  %1119 = vmatprep.subr.mxu0 %v384
  %1120 = vmatpush1.msra.mxu0 %v383
  %1121 = vmatprep.subr.mxu0 %v388
  %1122 = vmatpush1.msra.mxu0 %v387
  %1123 = vmatprep.subr.mxu0 %v392
  %1124 = vmatpush1.msra.mxu0 %v391
  %1125 = vmatprep.subr.mxu0 %v396
  %1126 = vmatpush1.msra.mxu0 %v395
  %1127 = vmatprep.subr.mxu0 %v400
  %1128 = vmatpush1.msra.mxu0 %v399
  %1129 = vmatprep.subr.mxu0 %v404
  %1130 = vmatpush1.msra.mxu0 %v403
  %1131 = vmatprep.subr.mxu0 %v408
  %1132 = vmatpush1.msra.mxu0 %v407
  %1133 = vmatprep.subr.mxu0 %v412
  %1134 = vmatpush1.msra.mxu0 %v411
  %1135 = vmatprep.subr.mxu0 %v416
  %1136 = vmatpush1.msra.mxu0 %v415
  %1137 = vmatprep.subr.mxu0 %v420
  %1138 = vmatpush1.msra.mxu0 %v419
  %1139 = vmatprep.subr.mxu0 %v424
  %1140 = vmatpush1.msra.mxu0 %v423
  %1141 = vmatprep.subr.mxu0 0.0
  %1142 = vmatpush1.msra.mxu0 0.0
  %1143 = vmatprep.subr.mxu0 0.0
  %1144 = vmatpush1.msra.mxu0 0.0
  %1145 = vmatprep.subr.mxu0 0.0
  %1146 = vmatpush1.msra.mxu0 0.0
  %1147 = vmatprep.subr.mxu0 0.0
  %1148 = vmatpush1.msra.mxu0 0.0
  %1149 = vmatprep.subr.mxu0 0.0
  %1150 = vmatpush1.msra.mxu0 0.0
  %1151 = vmatprep.subr.mxu0 0.0
  %1152 = vmatpush1.msra.mxu0 0.0
  %1153 = vmatprep.subr.mxu0 0.0
  %1154 = vmatpush1.msra.mxu0 0.0
  %1155 = vmatprep.subr.mxu0 0.0
  %1156 = vmatpush1.msra.mxu0 0.0
  %1157 = vmatprep.subr.mxu0 0.0
  %1158 = vmatpush1.msra.mxu0 0.0
  %1159 = vmatprep.subr.mxu0 0.0
  %1160 = vmatpush1.msra.mxu0 0.0
  %1161 = vmatprep.subr.mxu0 0.0
  %1162 = vmatpush1.msra.mxu0 0.0
  %1163 = vmatprep.subr.mxu0 0.0
  %1164 = vmatpush1.msra.mxu0 0.0
  %1165 = vmatprep.subr.mxu0 0.0
  %1166 = vmatpush1.msra.mxu0 0.0
  %1167 = vmatprep.subr.mxu0 0.0
  %1168 = vmatpush1.msra.mxu0 0.0
  %1169 = vmatprep.subr.mxu0 0.0
  %1170 = vmatpush1.msra.mxu0 0.0
  %1171 = vmatprep.subr.mxu0 0.0
  %1172 = vmatpush1.msra.mxu0 0.0
  %1173 = vmatprep.mubr.f32.mxu0 0.0
  %1174 = vmatmul.mubr.f32.gmra.mrb[0].mxu0 %v1103
  %v1175 = vpop.f32.mrb[0].mxu0
  %v1176 = vadd.f32 0.0, %v1175
  %v1177 = vpop.f32.mrb[0].mxu0
  %v1178 = vadd.f32 0.0, %v1177
  %1179 = vdwg.mxu0
  %1180 = vmatprep.subr.mxu0 %v366
  %1181 = vmatpush1.msra.mxu0 %v365
  %1182 = vmatprep.subr.mxu0 %v370
  %1183 = vmatpush1.msra.mxu0 %v369
  %1184 = vmatprep.subr.mxu0 %v374
  %1185 = vmatpush1.msra.mxu0 %v373
  %1186 = vmatprep.subr.mxu0 %v378
  %1187 = vmatpush1.msra.mxu0 %v377
  %1188 = vmatprep.subr.mxu0 %v382
  %1189 = vmatpush1.msra.mxu0 %v381
  %1190 = vmatprep.subr.mxu0 %v386
  %1191 = vmatpush1.msra.mxu0 %v385
  %1192 = vmatprep.subr.mxu0 %v390
  %1193 = vmatpush1.msra.mxu0 %v389
  %1194 = vmatprep.subr.mxu0 %v394
  %1195 = vmatpush1.msra.mxu0 %v393
  %1196 = vmatprep.subr.mxu0 %v398
  %1197 = vmatpush1.msra.mxu0 %v397
  %1198 = vmatprep.subr.mxu0 %v402
  %1199 = vmatpush1.msra.mxu0 %v401
  %1200 = vmatprep.subr.mxu0 %v406
  %1201 = vmatpush1.msra.mxu0 %v405
  %1202 = vmatprep.subr.mxu0 %v410
  %1203 = vmatpush1.msra.mxu0 %v409
  %1204 = vmatprep.subr.mxu0 %v414
  %1205 = vmatpush1.msra.mxu0 %v413
  %1206 = vmatprep.subr.mxu0 %v418
  %1207 = vmatpush1.msra.mxu0 %v417
  %1208 = vmatprep.subr.mxu0 %v422
  %1209 = vmatpush1.msra.mxu0 %v421
  %1210 = vmatprep.subr.mxu0 %v426
  %1211 = vmatpush1.msra.mxu0 %v425
  %1212 = vmatprep.subr.mxu0 0.0
  %1213 = vmatpush1.msra.mxu0 0.0
  %1214 = vmatprep.subr.mxu0 0.0
  %1215 = vmatpush1.msra.mxu0 0.0
  %1216 = vmatprep.subr.mxu0 0.0
  %1217 = vmatpush1.msra.mxu0 0.0
  %1218 = vmatprep.subr.mxu0 0.0
  %1219 = vmatpush1.msra.mxu0 0.0
  %1220 = vmatprep.subr.mxu0 0.0
  %1221 = vmatpush1.msra.mxu0 0.0
  %1222 = vmatprep.subr.mxu0 0.0
  %1223 = vmatpush1.msra.mxu0 0.0
  %1224 = vmatprep.subr.mxu0 0.0
  %1225 = vmatpush1.msra.mxu0 0.0
  %1226 = vmatprep.subr.mxu0 0.0
  %1227 = vmatpush1.msra.mxu0 0.0
  %1228 = vmatprep.subr.mxu0 0.0
  %1229 = vmatpush1.msra.mxu0 0.0
  %1230 = vmatprep.subr.mxu0 0.0
  %1231 = vmatpush1.msra.mxu0 0.0
  %1232 = vmatprep.subr.mxu0 0.0
  %1233 = vmatpush1.msra.mxu0 0.0
  %1234 = vmatprep.subr.mxu0 0.0
  %1235 = vmatpush1.msra.mxu0 0.0
  %1236 = vmatprep.subr.mxu0 0.0
  %1237 = vmatpush1.msra.mxu0 0.0
  %1238 = vmatprep.subr.mxu0 0.0
  %1239 = vmatpush1.msra.mxu0 0.0
  %1240 = vmatprep.subr.mxu0 0.0
  %1241 = vmatpush1.msra.mxu0 0.0
  %1242 = vmatprep.subr.mxu0 0.0
  %1243 = vmatpush1.msra.mxu0 0.0
  %1244 = vmatprep.mubr.f32.mxu0 0.0
  %1245 = vmatmul.mubr.f32.gmra.mrb[0].mxu0 %v1103
  %v1246 = vpop.f32.mrb[0].mxu0
  %v1247 = vadd.f32 0.0, %v1246
  %v1248 = vpop.f32.mrb[0].mxu0
  %v1249 = vadd.f32 0.0, %v1248
  %1250 = vdwg.mxu0
  %v1251 = vadd.f32 %v1105, %v1176
  %v1252 = vadd.f32 %v1106, %v1178
  %v1253 = vadd.f32 %v1107, %v1247
  %v1254 = vadd.f32 %v1108, %v1249
  %v1255 = vmul.f32 %v1251, 0.5
  %v1256 = vmul.f32 %v1252, 0.5
  %v1257 = vmul.f32 %v1253, 0.5
  %v1258 = vtanh.pop %v1255
  %v1259 = vtanh.pop %v1256
  %v1260 = vtanh.pop %v1257
  %v1261 = vmul.f32 %v1258, 0.5
  %v1262 = vmul.f32 %v1259, 0.5
  %v1263 = vmul.f32 %v1260, 0.5
  %v1264 = vadd.f32 %v1261, 0.5
  %v1265 = vadd.f32 %v1262, 0.5
  %v1266 = vadd.f32 %v1263, 0.5
  %v1267 = vtanh.pop %v1254
  %v1268 = vmul.f32 %v1265, %v1101
  %v1269 = vmul.f32 %v1264, %v1267
  %v1270 = vadd.f32 %v1268, %v1269
  %v1271 = vtanh.pop %v1270
  %v1272 = vmul.f32 %v1266, %v1271
  %1273 = vst [vmem:[#allocation3 + $0x20] sm:$0xff] %v1272
  %v1274 = vld [vmem:[#allocation2 + $0xa0] sm:$0xff]
  %v1275 = vld [vmem:[#allocation2 + $0xa8] sm:$0xff]
  %v1276 = vld [vmem:[#allocation2 + $0xb0] sm:$0xff]
  %v1277 = vld [vmem:[#allocation2 + $0xb8] sm:$0xff]
  %1278 = vmatprep.subr.mxu0 %v364
  %1279 = vmatpush1.msra.mxu0 %v363
  %1280 = vmatprep.subr.mxu0 %v368
  %1281 = vmatpush1.msra.mxu0 %v367
  %1282 = vmatprep.subr.mxu0 %v372
  %1283 = vmatpush1.msra.mxu0 %v371
  %1284 = vmatprep.subr.mxu0 %v376
  %1285 = vmatpush1.msra.mxu0 %v375
  %1286 = vmatprep.subr.mxu0 %v380
  %1287 = vmatpush1.msra.mxu0 %v379
  %1288 = vmatprep.subr.mxu0 %v384
  %1289 = vmatpush1.msra.mxu0 %v383
  %1290 = vmatprep.subr.mxu0 %v388
  %1291 = vmatpush1.msra.mxu0 %v387
  %1292 = vmatprep.subr.mxu0 %v392
  %1293 = vmatpush1.msra.mxu0 %v391
  %1294 = vmatprep.subr.mxu0 %v396
  %1295 = vmatpush1.msra.mxu0 %v395
  %1296 = vmatprep.subr.mxu0 %v400
  %1297 = vmatpush1.msra.mxu0 %v399
  %1298 = vmatprep.subr.mxu0 %v404
  %1299 = vmatpush1.msra.mxu0 %v403
  %1300 = vmatprep.subr.mxu0 %v408
  %1301 = vmatpush1.msra.mxu0 %v407
  %1302 = vmatprep.subr.mxu0 %v412
  %1303 = vmatpush1.msra.mxu0 %v411
  %1304 = vmatprep.subr.mxu0 %v416
  %1305 = vmatpush1.msra.mxu0 %v415
  %1306 = vmatprep.subr.mxu0 %v420
  %1307 = vmatpush1.msra.mxu0 %v419
  %1308 = vmatprep.subr.mxu0 %v424
  %1309 = vmatpush1.msra.mxu0 %v423
  %1310 = vmatprep.subr.mxu0 0.0
  %1311 = vmatpush1.msra.mxu0 0.0
  %1312 = vmatprep.subr.mxu0 0.0
  %1313 = vmatpush1.msra.mxu0 0.0
  %1314 = vmatprep.subr.mxu0 0.0
  %1315 = vmatpush1.msra.mxu0 0.0
  %1316 = vmatprep.subr.mxu0 0.0
  %1317 = vmatpush1.msra.mxu0 0.0
  %1318 = vmatprep.subr.mxu0 0.0
  %1319 = vmatpush1.msra.mxu0 0.0
  %1320 = vmatprep.subr.mxu0 0.0
  %1321 = vmatpush1.msra.mxu0 0.0
  %1322 = vmatprep.subr.mxu0 0.0
  %1323 = vmatpush1.msra.mxu0 0.0
  %1324 = vmatprep.subr.mxu0 0.0
  %1325 = vmatpush1.msra.mxu0 0.0
  %1326 = vmatprep.subr.mxu0 0.0
  %1327 = vmatpush1.msra.mxu0 0.0
  %1328 = vmatprep.subr.mxu0 0.0
  %1329 = vmatpush1.msra.mxu0 0.0
  %1330 = vmatprep.subr.mxu0 0.0
  %1331 = vmatpush1.msra.mxu0 0.0
  %1332 = vmatprep.subr.mxu0 0.0
  %1333 = vmatpush1.msra.mxu0 0.0
  %1334 = vmatprep.subr.mxu0 0.0
  %1335 = vmatpush1.msra.mxu0 0.0
  %1336 = vmatprep.subr.mxu0 0.0
  %1337 = vmatpush1.msra.mxu0 0.0
  %1338 = vmatprep.subr.mxu0 0.0
  %1339 = vmatpush1.msra.mxu0 0.0
  %1340 = vmatprep.subr.mxu0 0.0
  %1341 = vmatpush1.msra.mxu0 0.0
  %1342 = vmatprep.mubr.f32.mxu0 0.0
  %1343 = vmatmul.mubr.f32.gmra.mrb[0].mxu0 %v1272
  %v1344 = vpop.f32.mrb[0].mxu0
  %v1345 = vadd.f32 0.0, %v1344
  %v1346 = vpop.f32.mrb[0].mxu0
  %v1347 = vadd.f32 0.0, %v1346
  %1348 = vdwg.mxu0
  %1349 = vmatprep.subr.mxu0 %v366
  %1350 = vmatpush1.msra.mxu0 %v365
  %1351 = vmatprep.subr.mxu0 %v370
  %1352 = vmatpush1.msra.mxu0 %v369
  %1353 = vmatprep.subr.mxu0 %v374
  %1354 = vmatpush1.msra.mxu0 %v373
  %1355 = vmatprep.subr.mxu0 %v378
  %1356 = vmatpush1.msra.mxu0 %v377
  %1357 = vmatprep.subr.mxu0 %v382
  %1358 = vmatpush1.msra.mxu0 %v381
  %1359 = vmatprep.subr.mxu0 %v386
  %1360 = vmatpush1.msra.mxu0 %v385
  %1361 = vmatprep.subr.mxu0 %v390
  %1362 = vmatpush1.msra.mxu0 %v389
  %1363 = vmatprep.subr.mxu0 %v394
  %1364 = vmatpush1.msra.mxu0 %v393
  %1365 = vmatprep.subr.mxu0 %v398
  %1366 = vmatpush1.msra.mxu0 %v397
  %1367 = vmatprep.subr.mxu0 %v402
  %1368 = vmatpush1.msra.mxu0 %v401
  %1369 = vmatprep.subr.mxu0 %v406
  %1370 = vmatpush1.msra.mxu0 %v405
  %1371 = vmatprep.subr.mxu0 %v410
  %1372 = vmatpush1.msra.mxu0 %v409
  %1373 = vmatprep.subr.mxu0 %v414
  %1374 = vmatpush1.msra.mxu0 %v413
  %1375 = vmatprep.subr.mxu0 %v418
  %1376 = vmatpush1.msra.mxu0 %v417
  %1377 = vmatprep.subr.mxu0 %v422
  %1378 = vmatpush1.msra.mxu0 %v421
  %1379 = vmatprep.subr.mxu0 %v426
  %1380 = vmatpush1.msra.mxu0 %v425
  %1381 = vmatprep.subr.mxu0 0.0
  %1382 = vmatpush1.msra.mxu0 0.0
  %1383 = vmatprep.subr.mxu0 0.0
  %1384 = vmatpush1.msra.mxu0 0.0
  %1385 = vmatprep.subr.mxu0 0.0
  %1386 = vmatpush1.msra.mxu0 0.0
  %1387 = vmatprep.subr.mxu0 0.0
  %1388 = vmatpush1.msra.mxu0 0.0
  %1389 = vmatprep.subr.mxu0 0.0
  %1390 = vmatpush1.msra.mxu0 0.0
  %1391 = vmatprep.subr.mxu0 0.0
  %1392 = vmatpush1.msra.mxu0 0.0
  %1393 = vmatprep.subr.mxu0 0.0
  %1394 = vmatpush1.msra.mxu0 0.0
  %1395 = vmatprep.subr.mxu0 0.0
  %1396 = vmatpush1.msra.mxu0 0.0
  %1397 = vmatprep.subr.mxu0 0.0
  %1398 = vmatpush1.msra.mxu0 0.0
  %1399 = vmatprep.subr.mxu0 0.0
  %1400 = vmatpush1.msra.mxu0 0.0
  %1401 = vmatprep.subr.mxu0 0.0
  %1402 = vmatpush1.msra.mxu0 0.0
  %1403 = vmatprep.subr.mxu0 0.0
  %1404 = vmatpush1.msra.mxu0 0.0
  %1405 = vmatprep.subr.mxu0 0.0
  %1406 = vmatpush1.msra.mxu0 0.0
  %1407 = vmatprep.subr.mxu0 0.0
  %1408 = vmatpush1.msra.mxu0 0.0
  %1409 = vmatprep.subr.mxu0 0.0
  %1410 = vmatpush1.msra.mxu0 0.0
  %1411 = vmatprep.subr.mxu0 0.0
  %1412 = vmatpush1.msra.mxu0 0.0
  %1413 = vmatprep.mubr.f32.mxu0 0.0
  %1414 = vmatmul.mubr.f32.gmra.mrb[0].mxu0 %v1272
  %v1415 = vpop.f32.mrb[0].mxu0
  %v1416 = vadd.f32 0.0, %v1415
  %v1417 = vpop.f32.mrb[0].mxu0
  %v1418 = vadd.f32 0.0, %v1417
  %1419 = vdwg.mxu0
  %v1420 = vadd.f32 %v1274, %v1345
  %v1421 = vadd.f32 %v1275, %v1347
  %v1422 = vadd.f32 %v1276, %v1416
  %v1423 = vadd.f32 %v1277, %v1418
  %v1424 = vmul.f32 %v1420, 0.5
  %v1425 = vmul.f32 %v1421, 0.5
  %v1426 = vmul.f32 %v1422, 0.5
  %v1427 = vtanh.pop %v1424
  %v1428 = vtanh.pop %v1425
  %v1429 = vtanh.pop %v1426
  %v1430 = vmul.f32 %v1427, 0.5
  %v1431 = vmul.f32 %v1428, 0.5
  %v1432 = vmul.f32 %v1429, 0.5
  %v1433 = vadd.f32 %v1430, 0.5
  %v1434 = vadd.f32 %v1431, 0.5
  %v1435 = vadd.f32 %v1432, 0.5
  %v1436 = vtanh.pop %v1423
  %v1437 = vmul.f32 %v1434, %v1270
  %v1438 = vmul.f32 %v1433, %v1436
  %v1439 = vadd.f32 %v1437, %v1438
  %v1440 = vtanh.pop %v1439
  %v1441 = vmul.f32 %v1435, %v1440
  %1442 = vst [vmem:[#allocation3 + $0x28] sm:$0xff] %v1441
  %v1443 = vld [vmem:[#allocation2 + $0xc0] sm:$0xff]
  %v1444 = vld [vmem:[#allocation2 + $0xc8] sm:$0xff]
  %v1445 = vld [vmem:[#allocation2 + $0xd0] sm:$0xff]
  %v1446 = vld [vmem:[#allocation2 + $0xd8] sm:$0xff]
  %1447 = vmatprep.subr.mxu0 %v364
  %1448 = vmatpush1.msra.mxu0 %v363
  %1449 = vmatprep.subr.mxu0 %v368
  %1450 = vmatpush1.msra.mxu0 %v367
  %1451 = vmatprep.subr.mxu0 %v372
  %1452 = vmatpush1.msra.mxu0 %v371
  %1453 = vmatprep.subr.mxu0 %v376
  %1454 = vmatpush1.msra.mxu0 %v375
  %1455 = vmatprep.subr.mxu0 %v380
  %1456 = vmatpush1.msra.mxu0 %v379
  %1457 = vmatprep.subr.mxu0 %v384
  %1458 = vmatpush1.msra.mxu0 %v383
  %1459 = vmatprep.subr.mxu0 %v388
  %1460 = vmatpush1.msra.mxu0 %v387
  %1461 = vmatprep.subr.mxu0 %v392
  %1462 = vmatpush1.msra.mxu0 %v391
  %1463 = vmatprep.subr.mxu0 %v396
  %1464 = vmatpush1.msra.mxu0 %v395
  %1465 = vmatprep.subr.mxu0 %v400
  %1466 = vmatpush1.msra.mxu0 %v399
  %1467 = vmatprep.subr.mxu0 %v404
  %1468 = vmatpush1.msra.mxu0 %v403
  %1469 = vmatprep.subr.mxu0 %v408
  %1470 = vmatpush1.msra.mxu0 %v407
  %1471 = vmatprep.subr.mxu0 %v412
  %1472 = vmatpush1.msra.mxu0 %v411
  %1473 = vmatprep.subr.mxu0 %v416
  %1474 = vmatpush1.msra.mxu0 %v415
  %1475 = vmatprep.subr.mxu0 %v420
  %1476 = vmatpush1.msra.mxu0 %v419
  %1477 = vmatprep.subr.mxu0 %v424
  %1478 = vmatpush1.msra.mxu0 %v423
  %1479 = vmatprep.subr.mxu0 0.0
  %1480 = vmatpush1.msra.mxu0 0.0
  %1481 = vmatprep.subr.mxu0 0.0
  %1482 = vmatpush1.msra.mxu0 0.0
  %1483 = vmatprep.subr.mxu0 0.0
  %1484 = vmatpush1.msra.mxu0 0.0
  %1485 = vmatprep.subr.mxu0 0.0
  %1486 = vmatpush1.msra.mxu0 0.0
  %1487 = vmatprep.subr.mxu0 0.0
  %1488 = vmatpush1.msra.mxu0 0.0
  %1489 = vmatprep.subr.mxu0 0.0
  %1490 = vmatpush1.msra.mxu0 0.0
  %1491 = vmatprep.subr.mxu0 0.0
  %1492 = vmatpush1.msra.mxu0 0.0
  %1493 = vmatprep.subr.mxu0 0.0
  %1494 = vmatpush1.msra.mxu0 0.0
  %1495 = vmatprep.subr.mxu0 0.0
  %1496 = vmatpush1.msra.mxu0 0.0
  %1497 = vmatprep.subr.mxu0 0.0
  %1498 = vmatpush1.msra.mxu0 0.0
  %1499 = vmatprep.subr.mxu0 0.0
  %1500 = vmatpush1.msra.mxu0 0.0
  %1501 = vmatprep.subr.mxu0 0.0
  %1502 = vmatpush1.msra.mxu0 0.0
  %1503 = vmatprep.subr.mxu0 0.0
  %1504 = vmatpush1.msra.mxu0 0.0
  %1505 = vmatprep.subr.mxu0 0.0
  %1506 = vmatpush1.msra.mxu0 0.0
  %1507 = vmatprep.subr.mxu0 0.0
  %1508 = vmatpush1.msra.mxu0 0.0
  %1509 = vmatprep.subr.mxu0 0.0
  %1510 = vmatpush1.msra.mxu0 0.0
  %1511 = vmatprep.mubr.f32.mxu0 0.0
  %1512 = vmatmul.mubr.f32.gmra.mrb[0].mxu0 %v1441
  %v1513 = vpop.f32.mrb[0].mxu0
  %v1514 = vadd.f32 0.0, %v1513
  %v1515 = vpop.f32.mrb[0].mxu0
  %v1516 = vadd.f32 0.0, %v1515
  %1517 = vdwg.mxu0
  %1518 = vmatprep.subr.mxu0 %v366
  %1519 = vmatpush1.msra.mxu0 %v365
  %1520 = vmatprep.subr.mxu0 %v370
  %1521 = vmatpush1.msra.mxu0 %v369
  %1522 = vmatprep.subr.mxu0 %v374
  %1523 = vmatpush1.msra.mxu0 %v373
  %1524 = vmatprep.subr.mxu0 %v378
  %1525 = vmatpush1.msra.mxu0 %v377
  %1526 = vmatprep.subr.mxu0 %v382
  %1527 = vmatpush1.msra.mxu0 %v381
  %1528 = vmatprep.subr.mxu0 %v386
  %1529 = vmatpush1.msra.mxu0 %v385
  %1530 = vmatprep.subr.mxu0 %v390
  %1531 = vmatpush1.msra.mxu0 %v389
  %1532 = vmatprep.subr.mxu0 %v394
  %1533 = vmatpush1.msra.mxu0 %v393
  %1534 = vmatprep.subr.mxu0 %v398
  %1535 = vmatpush1.msra.mxu0 %v397
  %1536 = vmatprep.subr.mxu0 %v402
  %1537 = vmatpush1.msra.mxu0 %v401
  %1538 = vmatprep.subr.mxu0 %v406
  %1539 = vmatpush1.msra.mxu0 %v405
  %1540 = vmatprep.subr.mxu0 %v410
  %1541 = vmatpush1.msra.mxu0 %v409
  %1542 = vmatprep.subr.mxu0 %v414
  %1543 = vmatpush1.msra.mxu0 %v413
  %1544 = vmatprep.subr.mxu0 %v418
  %1545 = vmatpush1.msra.mxu0 %v417
  %1546 = vmatprep.subr.mxu0 %v422
  %1547 = vmatpush1.msra.mxu0 %v421
  %1548 = vmatprep.subr.mxu0 %v426
  %1549 = vmatpush1.msra.mxu0 %v425
  %1550 = vmatprep.subr.mxu0 0.0
  %1551 = vmatpush1.msra.mxu0 0.0
  %1552 = vmatprep.subr.mxu0 0.0
  %1553 = vmatpush1.msra.mxu0 0.0
  %1554 = vmatprep.subr.mxu0 0.0
  %1555 = vmatpush1.msra.mxu0 0.0
  %1556 = vmatprep.subr.mxu0 0.0
  %1557 = vmatpush1.msra.mxu0 0.0
  %1558 = vmatprep.subr.mxu0 0.0
  %1559 = vmatpush1.msra.mxu0 0.0
  %1560 = vmatprep.subr.mxu0 0.0
  %1561 = vmatpush1.msra.mxu0 0.0
  %1562 = vmatprep.subr.mxu0 0.0
  %1563 = vmatpush1.msra.mxu0 0.0
  %1564 = vmatprep.subr.mxu0 0.0
  %1565 = vmatpush1.msra.mxu0 0.0
  %1566 = vmatprep.subr.mxu0 0.0
  %1567 = vmatpush1.msra.mxu0 0.0
  %1568 = vmatprep.subr.mxu0 0.0
  %1569 = vmatpush1.msra.mxu0 0.0
  %1570 = vmatprep.subr.mxu0 0.0
  %1571 = vmatpush1.msra.mxu0 0.0
  %1572 = vmatprep.subr.mxu0 0.0
  %1573 = vmatpush1.msra.mxu0 0.0
  %1574 = vmatprep.subr.mxu0 0.0
  %1575 = vmatpush1.msra.mxu0 0.0
  %1576 = vmatprep.subr.mxu0 0.0
  %1577 = vmatpush1.msra.mxu0 0.0
  %1578 = vmatprep.subr.mxu0 0.0
  %1579 = vmatpush1.msra.mxu0 0.0
  %1580 = vmatprep.subr.mxu0 0.0
  %1581 = vmatpush1.msra.mxu0 0.0
  %1582 = vmatprep.mubr.f32.mxu0 0.0
  %1583 = vmatmul.mubr.f32.gmra.mrb[0].mxu0 %v1441
  %v1584 = vpop.f32.mrb[0].mxu0
  %v1585 = vadd.f32 0.0, %v1584
  %v1586 = vpop.f32.mrb[0].mxu0
  %v1587 = vadd.f32 0.0, %v1586
  %1588 = vdwg.mxu0
  %v1589 = vadd.f32 %v1443, %v1514
  %v1590 = vadd.f32 %v1444, %v1516
  %v1591 = vadd.f32 %v1445, %v1585
  %v1592 = vadd.f32 %v1446, %v1587
  %v1593 = vmul.f32 %v1589, 0.5
  %v1594 = vmul.f32 %v1590, 0.5
  %v1595 = vmul.f32 %v1591, 0.5
  %v1596 = vtanh.pop %v1593
  %v1597 = vtanh.pop %v1594
  %v1598 = vtanh.pop %v1595
  %v1599 = vmul.f32 %v1596, 0.5
  %v1600 = vmul.f32 %v1597, 0.5
  %v1601 = vmul.f32 %v1598, 0.5
  %v1602 = vadd.f32 %v1599, 0.5
  %v1603 = vadd.f32 %v1600, 0.5
  %v1604 = vadd.f32 %v1601, 0.5
  %v1605 = vtanh.pop %v1592
  %v1606 = vmul.f32 %v1603, %v1439
  %v1607 = vmul.f32 %v1602, %v1605
  %v1608 = vadd.f32 %v1606, %v1607
  %v1609 = vtanh.pop %v1608
  %v1610 = vmul.f32 %v1604, %v1609
  %1611 = vst [vmem:[#allocation3 + $0x30] sm:$0xff] %v1610
  %v1612 = vld [vmem:[#allocation2 + $0xe0] sm:$0xff]
  %v1613 = vld [vmem:[#allocation2 + $0xe8] sm:$0xff]
  %v1614 = vld [vmem:[#allocation2 + $0xf0] sm:$0xff]
  %v1615 = vld [vmem:[#allocation2 + $0xf8] sm:$0xff]
  %1616 = vmatprep.subr.mxu0 %v364
  %1617 = vmatpush1.msra.mxu0 %v363
  %1618 = vmatprep.subr.mxu0 %v368
  %1619 = vmatpush1.msra.mxu0 %v367
  %1620 = vmatprep.subr.mxu0 %v372
  %1621 = vmatpush1.msra.mxu0 %v371
  %1622 = vmatprep.subr.mxu0 %v376
  %1623 = vmatpush1.msra.mxu0 %v375
  %1624 = vmatprep.subr.mxu0 %v380
  %1625 = vmatpush1.msra.mxu0 %v379
  %1626 = vmatprep.subr.mxu0 %v384
  %1627 = vmatpush1.msra.mxu0 %v383
  %1628 = vmatprep.subr.mxu0 %v388
  %1629 = vmatpush1.msra.mxu0 %v387
  %1630 = vmatprep.subr.mxu0 %v392
  %1631 = vmatpush1.msra.mxu0 %v391
  %1632 = vmatprep.subr.mxu0 %v396
  %1633 = vmatpush1.msra.mxu0 %v395
  %1634 = vmatprep.subr.mxu0 %v400
  %1635 = vmatpush1.msra.mxu0 %v399
  %1636 = vmatprep.subr.mxu0 %v404
  %1637 = vmatpush1.msra.mxu0 %v403
  %1638 = vmatprep.subr.mxu0 %v408
  %1639 = vmatpush1.msra.mxu0 %v407
  %1640 = vmatprep.subr.mxu0 %v412
  %1641 = vmatpush1.msra.mxu0 %v411
  %1642 = vmatprep.subr.mxu0 %v416
  %1643 = vmatpush1.msra.mxu0 %v415
  %1644 = vmatprep.subr.mxu0 %v420
  %1645 = vmatpush1.msra.mxu0 %v419
  %1646 = vmatprep.subr.mxu0 %v424
  %1647 = vmatpush1.msra.mxu0 %v423
  %1648 = vmatprep.subr.mxu0 0.0
  %1649 = vmatpush1.msra.mxu0 0.0
  %1650 = vmatprep.subr.mxu0 0.0
  %1651 = vmatpush1.msra.mxu0 0.0
  %1652 = vmatprep.subr.mxu0 0.0
  %1653 = vmatpush1.msra.mxu0 0.0
  %1654 = vmatprep.subr.mxu0 0.0
  %1655 = vmatpush1.msra.mxu0 0.0
  %1656 = vmatprep.subr.mxu0 0.0
  %1657 = vmatpush1.msra.mxu0 0.0
  %1658 = vmatprep.subr.mxu0 0.0
  %1659 = vmatpush1.msra.mxu0 0.0
  %1660 = vmatprep.subr.mxu0 0.0
  %1661 = vmatpush1.msra.mxu0 0.0
  %1662 = vmatprep.subr.mxu0 0.0
  %1663 = vmatpush1.msra.mxu0 0.0
  %1664 = vmatprep.subr.mxu0 0.0
  %1665 = vmatpush1.msra.mxu0 0.0
  %1666 = vmatprep.subr.mxu0 0.0
  %1667 = vmatpush1.msra.mxu0 0.0
  %1668 = vmatprep.subr.mxu0 0.0
  %1669 = vmatpush1.msra.mxu0 0.0
  %1670 = vmatprep.subr.mxu0 0.0
  %1671 = vmatpush1.msra.mxu0 0.0
  %1672 = vmatprep.subr.mxu0 0.0
  %1673 = vmatpush1.msra.mxu0 0.0
  %1674 = vmatprep.subr.mxu0 0.0
  %1675 = vmatpush1.msra.mxu0 0.0
  %1676 = vmatprep.subr.mxu0 0.0
  %1677 = vmatpush1.msra.mxu0 0.0
  %1678 = vmatprep.subr.mxu0 0.0
  %1679 = vmatpush1.msra.mxu0 0.0
  %1680 = vmatprep.mubr.f32.mxu0 0.0
  %1681 = vmatmul.mubr.f32.gmra.mrb[0].mxu0 %v1610
  %v1682 = vpop.f32.mrb[0].mxu0
  %v1683 = vadd.f32 0.0, %v1682
  %v1684 = vpop.f32.mrb[0].mxu0
  %v1685 = vadd.f32 0.0, %v1684
  %1686 = vdwg.mxu0
  %1687 = vmatprep.subr.mxu0 %v366
  %1688 = vmatpush1.msra.mxu0 %v365
  %1689 = vmatprep.subr.mxu0 %v370
  %1690 = vmatpush1.msra.mxu0 %v369
  %1691 = vmatprep.subr.mxu0 %v374
  %1692 = vmatpush1.msra.mxu0 %v373
  %1693 = vmatprep.subr.mxu0 %v378
  %1694 = vmatpush1.msra.mxu0 %v377
  %1695 = vmatprep.subr.mxu0 %v382
  %1696 = vmatpush1.msra.mxu0 %v381
  %1697 = vmatprep.subr.mxu0 %v386
  %1698 = vmatpush1.msra.mxu0 %v385
  %1699 = vmatprep.subr.mxu0 %v390
  %1700 = vmatpush1.msra.mxu0 %v389
  %1701 = vmatprep.subr.mxu0 %v394
  %1702 = vmatpush1.msra.mxu0 %v393
  %1703 = vmatprep.subr.mxu0 %v398
  %1704 = vmatpush1.msra.mxu0 %v397
  %1705 = vmatprep.subr.mxu0 %v402
  %1706 = vmatpush1.msra.mxu0 %v401
  %1707 = vmatprep.subr.mxu0 %v406
  %1708 = vmatpush1.msra.mxu0 %v405
  %1709 = vmatprep.subr.mxu0 %v410
  %1710 = vmatpush1.msra.mxu0 %v409
  %1711 = vmatprep.subr.mxu0 %v414
  %1712 = vmatpush1.msra.mxu0 %v413
  %1713 = vmatprep.subr.mxu0 %v418
  %1714 = vmatpush1.msra.mxu0 %v417
  %1715 = vmatprep.subr.mxu0 %v422
  %1716 = vmatpush1.msra.mxu0 %v421
  %1717 = vmatprep.subr.mxu0 %v426
  %1718 = vmatpush1.msra.mxu0 %v425
  %1719 = vmatprep.subr.mxu0 0.0
  %1720 = vmatpush1.msra.mxu0 0.0
  %1721 = vmatprep.subr.mxu0 0.0
  %1722 = vmatpush1.msra.mxu0 0.0
  %1723 = vmatprep.subr.mxu0 0.0
  %1724 = vmatpush1.msra.mxu0 0.0
  %1725 = vmatprep.subr.mxu0 0.0
  %1726 = vmatpush1.msra.mxu0 0.0
  %1727 = vmatprep.subr.mxu0 0.0
  %1728 = vmatpush1.msra.mxu0 0.0
  %1729 = vmatprep.subr.mxu0 0.0
  %1730 = vmatpush1.msra.mxu0 0.0
  %1731 = vmatprep.subr.mxu0 0.0
  %1732 = vmatpush1.msra.mxu0 0.0
  %1733 = vmatprep.subr.mxu0 0.0
  %1734 = vmatpush1.msra.mxu0 0.0
  %1735 = vmatprep.subr.mxu0 0.0
  %1736 = vmatpush1.msra.mxu0 0.0
  %1737 = vmatprep.subr.mxu0 0.0
  %1738 = vmatpush1.msra.mxu0 0.0
  %1739 = vmatprep.subr.mxu0 0.0
  %1740 = vmatpush1.msra.mxu0 0.0
  %1741 = vmatprep.subr.mxu0 0.0
  %1742 = vmatpush1.msra.mxu0 0.0
  %1743 = vmatprep.subr.mxu0 0.0
  %1744 = vmatpush1.msra.mxu0 0.0
  %1745 = vmatprep.subr.mxu0 0.0
  %1746 = vmatpush1.msra.mxu0 0.0
  %1747 = vmatprep.subr.mxu0 0.0
  %1748 = vmatpush1.msra.mxu0 0.0
  %1749 = vmatprep.subr.mxu0 0.0
  %1750 = vmatpush1.msra.mxu0 0.0
  %1751 = vmatprep.mubr.f32.mxu0 0.0
  %1752 = vmatmul.mubr.f32.gmra.mrb[0].mxu0 %v1610
  %v1753 = vpop.f32.mrb[0].mxu0
  %v1754 = vadd.f32 0.0, %v1753
  %v1755 = vpop.f32.mrb[0].mxu0
  %v1756 = vadd.f32 0.0, %v1755
  %1757 = vdwg.mxu0
  %v1758 = vadd.f32 %v1612, %v1683
  %v1759 = vadd.f32 %v1613, %v1685
  %v1760 = vadd.f32 %v1614, %v1754
  %v1761 = vadd.f32 %v1615, %v1756
  %v1762 = vmul.f32 %v1758, 0.5
  %v1763 = vmul.f32 %v1759, 0.5
  %v1764 = vmul.f32 %v1760, 0.5
  %v1765 = vtanh.pop %v1762
  %v1766 = vtanh.pop %v1763
  %v1767 = vtanh.pop %v1764
  %v1768 = vmul.f32 %v1765, 0.5
  %v1769 = vmul.f32 %v1766, 0.5
  %v1770 = vmul.f32 %v1767, 0.5
  %v1771 = vadd.f32 %v1768, 0.5
  %v1772 = vadd.f32 %v1769, 0.5
  %v1773 = vadd.f32 %v1770, 0.5
  %v1774 = vtanh.pop %v1761
  %v1775 = vmul.f32 %v1772, %v1608
  %v1776 = vmul.f32 %v1771, %v1774
  %v1777 = vadd.f32 %v1775, %v1776
  %v1778 = vtanh.pop %v1777
  %v1779 = vmul.f32 %v1773, %v1778
  %1780 = vst [vmem:[#allocation3 + $0x38] sm:$0xff] %v1779
  %v1781 = vld [vmem:[#allocation3] sm:$0xff]
  %v1782 = vld [vmem:[#allocation3 + $0x8] sm:$0xff]
  %v1783 = vld [vmem:[#allocation3 + $0x10] sm:$0xff]
  %v1784 = vld [vmem:[#allocation3 + $0x18] sm:$0xff]
  %v1785 = vld [vmem:[#allocation3 + $0x20] sm:$0xff]
  %v1786 = vld [vmem:[#allocation3 + $0x28] sm:$0xff]
  %v1787 = vld [vmem:[#allocation3 + $0x30] sm:$0xff]
  %v1788 = vld [vmem:[#allocation3 + $0x38] sm:$0xff]
  %v1789 = vld [vmem:[%s4] sm:$0xff]
  %v1790 = vld [vmem:[%s4 + $0x8] sm:$0xff]
  %v1791 = vld [vmem:[%s4 + $0x10] sm:$0xff]
  %v1792 = vld [vmem:[%s4 + $0x18] sm:$0xff]
  %v1793 = vld [vmem:[%s4 + $0x20] sm:$0xff]
  %v1794 = vld [vmem:[%s4 + $0x28] sm:$0xff]
  %v1795 = vld [vmem:[%s4 + $0x30] sm:$0xff]
  %v1796 = vld [vmem:[%s4 + $0x38] sm:$0xff]
  %v1797 = vld [vmem:[%s4 + $0x40] sm:$0xff]
  %v1798 = vld [vmem:[%s4 + $0x48] sm:$0xff]
  %v1799 = vld [vmem:[%s4 + $0x50] sm:$0xff]
  %v1800 = vld [vmem:[%s4 + $0x58] sm:$0xff]
  %v1801 = vld [vmem:[%s4 + $0x60] sm:$0xff]
  %v1802 = vld [vmem:[%s4 + $0x68] sm:$0xff]
  %v1803 = vld [vmem:[%s4 + $0x70] sm:$0xff]
  %v1804 = vld [vmem:[%s4 + $0x78] sm:$0xff]
  %v1805 = vld [vmem:[%s5] sm:$0x1]
  %v1807 = vlaneseq
  %v1808 = vshrl.u32 %v1807, 7
  %v1809 = vsub.s32 0, %v1808
  %v1810 = vrot.slane %v1805, %v1809
  %1812 = vmatprep.subr.mxu0 0.0
  %1813 = vmatpush1.msra.mxu0 %v1789
  %1814 = vmatprep.subr.mxu0 0.0
  %1815 = vmatpush1.msra.mxu0 %v1790
  %1816 = vmatprep.subr.mxu0 0.0
  %1817 = vmatpush1.msra.mxu0 %v1791
  %1818 = vmatprep.subr.mxu0 0.0
  %1819 = vmatpush1.msra.mxu0 %v1792
  %1820 = vmatprep.subr.mxu0 0.0
  %1821 = vmatpush1.msra.mxu0 %v1793
  %1822 = vmatprep.subr.mxu0 0.0
  %1823 = vmatpush1.msra.mxu0 %v1794
  %1824 = vmatprep.subr.mxu0 0.0
  %1825 = vmatpush1.msra.mxu0 %v1795
  %1826 = vmatprep.subr.mxu0 0.0
  %1827 = vmatpush1.msra.mxu0 %v1796
  %1828 = vmatprep.subr.mxu0 0.0
  %1829 = vmatpush1.msra.mxu0 %v1797
  %1830 = vmatprep.subr.mxu0 0.0
  %1831 = vmatpush1.msra.mxu0 %v1798
  %1832 = vmatprep.subr.mxu0 0.0
  %1833 = vmatpush1.msra.mxu0 %v1799
  %1834 = vmatprep.subr.mxu0 0.0
  %1835 = vmatpush1.msra.mxu0 %v1800
  %1836 = vmatprep.subr.mxu0 0.0
  %1837 = vmatpush1.msra.mxu0 %v1801
  %1838 = vmatprep.subr.mxu0 0.0
  %1839 = vmatpush1.msra.mxu0 %v1802
  %1840 = vmatprep.subr.mxu0 0.0
  %1841 = vmatpush1.msra.mxu0 %v1803
  %1842 = vmatprep.subr.mxu0 0.0
  %1843 = vmatpush1.msra.mxu0 %v1804
  %1844 = vmatprep.subr.mxu0 0.0
  %1845 = vmatpush1.msra.mxu0 0.0
  %1846 = vmatprep.subr.mxu0 0.0
  %1847 = vmatpush1.msra.mxu0 0.0
  %1848 = vmatprep.subr.mxu0 0.0
  %1849 = vmatpush1.msra.mxu0 0.0
  %1850 = vmatprep.subr.mxu0 0.0
  %1851 = vmatpush1.msra.mxu0 0.0
  %1852 = vmatprep.subr.mxu0 0.0
  %1853 = vmatpush1.msra.mxu0 0.0
  %1854 = vmatprep.subr.mxu0 0.0
  %1855 = vmatpush1.msra.mxu0 0.0
  %1856 = vmatprep.subr.mxu0 0.0
  %1857 = vmatpush1.msra.mxu0 0.0
  %1858 = vmatprep.subr.mxu0 0.0
  %1859 = vmatpush1.msra.mxu0 0.0
  %1860 = vmatprep.subr.mxu0 0.0
  %1861 = vmatpush1.msra.mxu0 0.0
  %1862 = vmatprep.subr.mxu0 0.0
  %1863 = vmatpush1.msra.mxu0 0.0
  %1864 = vmatprep.subr.mxu0 0.0
  %1865 = vmatpush1.msra.mxu0 0.0
  %1866 = vmatprep.subr.mxu0 0.0
  %1867 = vmatpush1.msra.mxu0 0.0
  %1868 = vmatprep.subr.mxu0 0.0
  %1869 = vmatpush1.msra.mxu0 0.0
  %1870 = vmatprep.subr.mxu0 0.0
  %1871 = vmatpush1.msra.mxu0 0.0
  %1872 = vmatprep.subr.mxu0 0.0
  %1873 = vmatpush1.msra.mxu0 0.0
  %1874 = vmatprep.subr.mxu0 0.0
  %1875 = vmatpush1.msra.mxu0 0.0
  %1876 = vmatprep.mubr.f32.mxu0 0.0
  %1877 = vmatmul.mubr.f32.gmra.mrb[0].mxu0 %v1781
  %v1878 = vpop.f32.mrb[0].mxu0
  %v1879 = vadd.f32 %v1810, %v1878
  %v1880 = vpop.f32.mrb[0].mxu0
  %1881 = vmatprep.mubr.f32.mxu0 0.0
  %1882 = vmatmul.mubr.f32.gmra.mrb[0].mxu0 %v1782
  %v1883 = vpop.f32.mrb[0].mxu0
  %v1884 = vadd.f32 %v1810, %v1883
  %v1885 = vpop.f32.mrb[0].mxu0
  %1886 = vmatprep.mubr.f32.mxu0 0.0
  %1887 = vmatmul.mubr.f32.gmra.mrb[0].mxu0 %v1783
  %v1888 = vpop.f32.mrb[0].mxu0
  %v1889 = vadd.f32 %v1810, %v1888
  %v1890 = vpop.f32.mrb[0].mxu0
  %1891 = vmatprep.mubr.f32.mxu0 0.0
  %1892 = vmatmul.mubr.f32.gmra.mrb[0].mxu0 %v1784
  %v1893 = vpop.f32.mrb[0].mxu0
  %v1894 = vadd.f32 %v1810, %v1893
  %v1895 = vpop.f32.mrb[0].mxu0
  %1896 = vmatprep.mubr.f32.mxu0 0.0
  %1897 = vmatmul.mubr.f32.gmra.mrb[0].mxu0 %v1785
  %v1898 = vpop.f32.mrb[0].mxu0
  %v1899 = vadd.f32 %v1810, %v1898
  %v1900 = vpop.f32.mrb[0].mxu0
  %1901 = vmatprep.mubr.f32.mxu0 0.0
  %1902 = vmatmul.mubr.f32.gmra.mrb[0].mxu0 %v1786
  %v1903 = vpop.f32.mrb[0].mxu0
  %v1904 = vadd.f32 %v1810, %v1903
  %v1905 = vpop.f32.mrb[0].mxu0
  %1906 = vmatprep.mubr.f32.mxu0 0.0
  %1907 = vmatmul.mubr.f32.gmra.mrb[0].mxu0 %v1787
  %v1908 = vpop.f32.mrb[0].mxu0
  %v1909 = vadd.f32 %v1810, %v1908
  %v1910 = vpop.f32.mrb[0].mxu0
  %1911 = vmatprep.mubr.f32.mxu0 0.0
  %1912 = vmatmul.mubr.f32.gmra.mrb[0].mxu0 %v1788
  %v1913 = vpop.f32.mrb[0].mxu0
  %v1914 = vadd.f32 %v1810, %v1913
  %v1915 = vpop.f32.mrb[0].mxu0
  %1916 = vdwg.mxu0
  %1917 = vst [vmem:[%s8] sm:$0xff] %v1879
  %1918 = vst [vmem:[%s8 + $0x8] sm:$0xff] %v1884
  %1919 = vst [vmem:[%s8 + $0x10] sm:$0xff] %v1889
  %1920 = vst [vmem:[%s8 + $0x18] sm:$0xff] %v1894
  %1921 = vst [vmem:[%s8 + $0x20] sm:$0xff] %v1899
  %1922 = vst [vmem:[%s8 + $0x28] sm:$0xff] %v1904
  %1923 = vst [vmem:[%s8 + $0x30] sm:$0xff] %v1909
  %1924 = vst [vmem:[%s8 + $0x38] sm:$0xff] %v1914
  // Predicated region
  $region34: #{vanilla_lstm_forward.1} parent=0 // pred_check
    _
  $region35: #{vanilla_lstm_forward.1} parent=0 // pred_check_branch
    %1926 = sbr.rel (0) target = $region37
  $region36: #{vanilla_lstm_forward.1} parent=0 // pred_region
    _
  $region37: #{vanilla_lstm_forward.1} parent=0 // pred_fallthru
    _
  // Predicated region
  $region38: #{vanilla_lstm_forward.1} parent=0 // pred_check
    _
  $region39: #{vanilla_lstm_forward.1} parent=0 // pred_check_branch
    %1928 = sbr.rel (0) target = $region41
  $region40: #{vanilla_lstm_forward.1} parent=0 // pred_region
    _
  $region41: #{vanilla_lstm_forward.1} parent=0 // pred_fallthru
    _

</llo_original>
